<compile_context>
chip_gen: v6e
topology: v6e:2x2x1
jax: 0.10.0
libtpu: 0.0.40
codegen_flags: <defaults>
</compile_context>

<pallas_src>
import math

import jax
import jax.numpy as jnp
from jax.experimental import pallas as pl
from jax.experimental.pallas import tpu as pltpu

DIMENSION = 4   # state dimension; module input is [B, 2*DIMENSION]
HIDDEN = 50


def _round_up(x, m):
    return ((x + m - 1) // m) * m


def _softplus(v):
    # Matches torch.nn.Softplus(beta=1, threshold=20)
    return jnp.where(v > 20.0, v, jnp.log1p(jnp.exp(jnp.minimum(v, 20.0))))


# -----------------------------------------------------------------------------
# Packed forward math (runs inside the kernel).
#   ld(name) -> reads the packed parameter ref at the point of use (lazy).
# -----------------------------------------------------------------------------
def _picnn_forward_packed(x0, x0s, ld, dot_dtype):
    D, H = DIMENSION, HIDDEN

    def dot(a, w):
        # MXU matmul; bf16 operands when dot_dtype==bf16, always f32 accumulate.
        return jnp.dot(a.astype(dot_dtype), w.astype(dot_dtype),
                       preferred_element_type=jnp.float32)

    # ---- input stage: one packed dot over x0 ---------------------------------
    # columns: [clat_in_mid (4) | x_lateral_1 (50) | x_input (50)]
    y = dot(x0, ld("in_pack_w")) + ld("in_pack_b")
    mid_in = y[:, 0:D]
    xstar_pre = y[:, D:D + H]
    x_pre = y[:, D + H:D + 2 * H]
    x_star = _softplus(xstar_pre + dot(x0s * mid_in, ld("clat_in_w")))
    x = _softplus(x_pre)

    # ---- hidden stages -------------------------------------------------------
    # packed columns: [x_lateral_{k+1} (50) | cprop_{k}_mid (50) |
    #                  clat_{k}_mid (4) | x_prop_{k} (50)]
    for k in range(1, 5):
        y = dot(x, ld(f"stage{k}_pack_w")) + ld(f"stage{k}_pack_b")
        xlat_pre = y[:, 0:H]
        mid_c = _softplus(y[:, H:2 * H])
        mid_l = y[:, 2 * H:2 * H + D]
        x_pre = y[:, 2 * H + D:3 * H + D]
        # the two dots below are independent -> can overlap in the MXU pipeline
        x_star = _softplus(xlat_pre
                           + dot(x_star * mid_c, ld(f"cprop{k}_w"))
                           + dot(x0s * mid_l, ld(f"clat{k}_w")))
        x = _softplus(x_pre)

    # ---- output stage --------------------------------------------------------
    # packed columns: [x_lateral_out (1) | cprop_out_mid (50) | clat_out_mid (4)]
    y = dot(x, ld("out_pack_w")) + ld("out_pack_b")
    out_pre = y[:, 0:1]
    mid_c = _softplus(y[:, 1:1 + H])
    mid_l = y[:, 1 + H:1 + H + D]
    out = _softplus(out_pre
                    + dot(x_star * mid_c, ld("cprop_out_w"))
                    + dot(x0s * mid_l, ld("clat_out_w")))
    return out


def _make_kernel(names, dot_dtype):
    n = len(names)

    def kernel(*refs):
        # refs = (x_ref, *param_refs, out_ref)
        x_ref = refs[0]
        prefs = dict(zip(names, refs[1:1 + n]))
        out_ref = refs[1 + n]

        xin = x_ref[...]                       # [TB, 2*DIMENSION]
        x0 = xin[:, :DIMENSION]
        x0s = xin[:, DIMENSION:]

        # Lazy per-use parameter reads keep vreg pressure low.
        def ld(name):
            return prefs[name][...]

        out_ref[...] = _picnn_forward_packed(x0, x0s, ld, dot_dtype)

    return kernel


# -----------------------------------------------------------------------------
# Host-side weight packing (raw per-layer params -> packed kernel params).
# Raw weights are stored pre-transposed as [in, out]; biases as [1, out].
# -----------------------------------------------------------------------------
def pack_params(p, dot_dtype=jnp.float32):
    def wd(a):
        return a.astype(dot_dtype)

    packed = {}
    packed["in_pack_w"] = wd(jnp.concatenate(
        [p["clat_in_mid_w"], p["x_lat1_w"], p["x_input_w"]], axis=1))
    packed["in_pack_b"] = jnp.concatenate(
        [p["clat_in_mid_b"], p["x_lat1_b"], p["x_input_b"]], axis=1)
    packed["clat_in_w"] = wd(p["clat_in_w"])

    for k in range(1, 5):
        packed[f"stage{k}_pack_w"] = wd(jnp.concatenate(
            [p[f"x_lat{k + 1}_w"], p[f"cprop{k}_mid_w"],
             p[f"clat{k}_mid_w"], p[f"xprop{k}_w"]], axis=1))
        packed[f"stage{k}_pack_b"] = jnp.concatenate(
            [p[f"x_lat{k + 1}_b"], p[f"cprop{k}_mid_b"],
             p[f"clat{k}_mid_b"], p[f"xprop{k}_b"]], axis=1)
        packed[f"cprop{k}_w"] = wd(p[f"cprop{k}_w"])
        packed[f"clat{k}_w"] = wd(p[f"clat{k}_w"])

    packed["out_pack_w"] = wd(jnp.concatenate(
        [p["x_lat_out_w"], p["cprop_out_mid_w"], p["clat_out_mid_w"]], axis=1))
    packed["out_pack_b"] = jnp.concatenate(
        [p["x_lat_out_b"], p["cprop_out_mid_b"], p["clat_out_mid_b"]], axis=1)
    packed["cprop_out_w"] = wd(p["cprop_out_w"])
    packed["clat_out_w"] = wd(p["clat_out_w"])
    return packed


# -----------------------------------------------------------------------------
# Wrapper: batch grid, resident weights, parallel semantics.
# -----------------------------------------------------------------------------
def dissipation_forward(x, params, *, batch_tile=512, use_bf16=False):
    """x: [B, 2*DIMENSION]; params: dict of raw per-layer weights (see init_params)."""
    x = jnp.asarray(x, jnp.float32)            # matches `input.float()`
    B, F = x.shape
    assert F == 2 * DIMENSION, x.shape

    dot_dtype = jnp.bfloat16 if use_bf16 else jnp.float32
    packed = pack_params(params, dot_dtype)

    # Batch tile: TB=512 fits comfortably in scoped VMEM on v5e/v6e and v7x
    # (a few MB of live f32 activations + <0.2 MB of resident weights).
    tb = min(batch_tile, _round_up(B, 8))
    pb = _round_up(B, tb)
    if pb != B:
        x = jnp.pad(x, ((0, pb - B), (0, 0)))

    names = list(packed.keys())
    vals = [packed[n] for n in names]

    grid = (pb // tb,)
    in_specs = [pl.BlockSpec((tb, 2 * DIMENSION), lambda i: (i, 0))]
    # Weights: full-array blocks with constant index_map -> DMA'd once,
    # VMEM-resident across all grid steps.
    in_specs += [pl.BlockSpec(v.shape, lambda i: (0, 0)) for v in vals]
    out_spec = pl.BlockSpec((tb, 1), lambda i: (i, 0))

    kernel = _make_kernel(names, dot_dtype)
    out = pl.pallas_call(
        kernel,
        out_shape=jax.ShapeDtypeStruct((pb, 1), jnp.float32),
        grid=grid,
        in_specs=in_specs,
        out_specs=out_spec,
        compiler_params=pltpu.CompilerParams(
            # batch axis is embarrassingly parallel -> megacore sharding on v7x
            dimension_semantics=("parallel",),
        ),
    )(x, *vals)
    return out[:B]


# -----------------------------------------------------------------------------
# Pure-JAX reference using the RAW (unpacked) parameters -- exactly the
# PyTorch module's forward math.  Used only for validation.
# -----------------------------------------------------------------------------
def _forward_ref(x0, x0s, p):
    def lin(v, name, bias=True):
        y = jnp.dot(v, p[name + "_w"], preferred_element_type=jnp.float32)
        if bias:
            y = y + p[name + "_b"]
        return y

    x_star = _softplus(
        lin(x0, "x_lat1")
        + lin(x0s * lin(x0, "clat_in_mid"), "clat_in", bias=False))
    x = _softplus(lin(x0, "x_input"))
    for k in range(1, 5):
        x_star = _softplus(
            lin(x, f"x_lat{k + 1}")
            + lin(x_star * _softplus(lin(x, f"cprop{k}_mid")), f"cprop{k}", bias=False)
            + lin(x0s * lin(x, f"clat{k}_mid"), f"clat{k}", bias=False))
        x = _softplus(lin(x, f"xprop{k}"))
    return _softplus(
        lin(x, "x_lat_out")
        + lin(x_star * _softplus(lin(x, "cprop_out_mid")), "cprop_out", bias=False)
        + lin(x0s * lin(x, "clat_out_mid"), "clat_out", bias=False))


def init_params(key):
    """Deterministic init mimicking PyTorch nn.Linear default (U[-1/sqrt(fan_in), +])."""
    p = {}

    def linear(name, in_f, out_f, bias=True):
        nonlocal key
        key, kw, kb = jax.random.split(key, 3)
        bound = 1.0 / math.sqrt(in_f)
        # stored transposed: [in, out] so forward computes x @ W_t
        p[name + "_w"] = jax.random.uniform(kw, (in_f, out_f), jnp.float32, -bound, bound)
        if bias:
            p[name + "_b"] = jax.random.uniform(kb, (1, out_f), jnp.float32, -bound, bound)

    linear("x_input", DIMENSION, HIDDEN)
    for k in range(1, 5):
        linear(f"xprop{k}", HIDDEN, HIDDEN)
    linear("x_lat1", DIMENSION, HIDDEN)
    for k in range(2, 6):
        linear(f"x_lat{k}", HIDDEN, HIDDEN)
    linear("x_lat_out", HIDDEN, 1)
    for k in range(1, 5):
        linear(f"cprop{k}", HIDDEN, HIDDEN, bias=False)
    linear("cprop_out", HIDDEN, 1, bias=False)
    for k in range(1, 5):
        linear(f"cprop{k}_mid", HIDDEN, HIDDEN)
    linear("cprop_out_mid", HIDDEN, HIDDEN)
    linear("clat_in", DIMENSION, HIDDEN, bias=False)
    for k in range(1, 5):
        linear(f"clat{k}", DIMENSION, HIDDEN, bias=False)
    linear("clat_out", DIMENSION, 1, bias=False)
    linear("clat_in_mid", DIMENSION, DIMENSION)
    for k in range(1, 5):
        linear(f"clat{k}_mid", HIDDEN, DIMENSION)
    linear("clat_out_mid", HIDDEN, DIMENSION)
    return p


if __name__ == "__main__":
    root = jax.random.PRNGKey(0)
    pkey, xkey, xkey2 = jax.random.split(root, 3)

    params = init_params(pkey)

    # Small deterministic input consistent with the module: [B, 2*DIMENSION]
    B = 2
    x = jax.random.normal(xkey, (B, 2 * DIMENSION), jnp.float32)
    ref = _forward_ref(x[:, :DIMENSION], x[:, DIMENSION:], params)

    # f32 MXU path (exact module semantics)
    out = jax.block_until_ready(dissipation_forward(x, params, use_bf16=False))
    assert out.shape == (B, 1), out.shape
    assert out.dtype == jnp.float32
    assert jnp.allclose(out, ref, atol=1e-3, rtol=1e-3), (out, ref)

    # bf16-MXU path (recommended for v5e/v6e/v7x throughput); f32 accumulation,
    # f32 elementwise -> looser tolerance against the f32 reference.
    out_bf16 = jax.block_until_ready(dissipation_forward(x, params, use_bf16=True))
    assert jnp.allclose(out_bf16, ref, atol=5e-2, rtol=5e-2), (out_bf16, ref)

    # Larger batch exercising the batch grid (>1 step) + padding path.
    B2 = 1000
    x2 = jax.random.normal(xkey2, (B2, 2 * DIMENSION), jnp.float32)
    ref2 = _forward_ref(x2[:, :DIMENSION], x2[:, DIMENSION:], params)
    out2 = jax.block_until_ready(dissipation_forward(x2, params, use_bf16=False))
    assert out2.shape == (B2, 1)
    assert jnp.allclose(out2, ref2, atol=1e-3, rtol=1e-3)

    print("KERNEL_OK")
</pallas_src>

<mosaic_0001>
module attributes {stable_mosaic.version = 11 : i64} {
  func.func @kernel(%arg0: i32, %arg1: memref<8x8xf32, #tpu.memory_space<vmem>>, %arg2: memref<4x104xf32, #tpu.memory_space<vmem>>, %arg3: memref<1x104xf32, #tpu.memory_space<vmem>>, %arg4: memref<4x50xf32, #tpu.memory_space<vmem>>, %arg5: memref<50x154xf32, #tpu.memory_space<vmem>>, %arg6: memref<1x154xf32, #tpu.memory_space<vmem>>, %arg7: memref<50x50xf32, #tpu.memory_space<vmem>>, %arg8: memref<4x50xf32, #tpu.memory_space<vmem>>, %arg9: memref<50x154xf32, #tpu.memory_space<vmem>>, %arg10: memref<1x154xf32, #tpu.memory_space<vmem>>, %arg11: memref<50x50xf32, #tpu.memory_space<vmem>>, %arg12: memref<4x50xf32, #tpu.memory_space<vmem>>, %arg13: memref<50x154xf32, #tpu.memory_space<vmem>>, %arg14: memref<1x154xf32, #tpu.memory_space<vmem>>, %arg15: memref<50x50xf32, #tpu.memory_space<vmem>>, %arg16: memref<4x50xf32, #tpu.memory_space<vmem>>, %arg17: memref<50x154xf32, #tpu.memory_space<vmem>>, %arg18: memref<1x154xf32, #tpu.memory_space<vmem>>, %arg19: memref<50x50xf32, #tpu.memory_space<vmem>>, %arg20: memref<4x50xf32, #tpu.memory_space<vmem>>, %arg21: memref<50x55xf32, #tpu.memory_space<vmem>>, %arg22: memref<1x55xf32, #tpu.memory_space<vmem>>, %arg23: memref<50x1xf32, #tpu.memory_space<vmem>>, %arg24: memref<4x1xf32, #tpu.memory_space<vmem>>, %arg25: memref<8x1xf32, #tpu.memory_space<vmem>>) attributes {dimension_semantics = [#tpu.dimension_semantics<parallel>], iteration_bounds = array<i64: 1>, scalar_prefetch = 0 : i64, scratch_operands = 0 : i64, tpu.core_type = #tpu.core_type<tc>, window_params = [{transform_indices = @transform_0, window_bounds = array<i64: 8, 8>}, {pipeline_mode = #tpu.pipeline_mode<synchronous>, transform_indices = @transform_1, window_bounds = array<i64: 4, 104>}, {pipeline_mode = #tpu.pipeline_mode<synchronous>, transform_indices = @transform_2, window_bounds = array<i64: 1, 104>}, {pipeline_mode = #tpu.pipeline_mode<synchronous>, transform_indices = @transform_3, window_bounds = array<i64: 4, 50>}, {pipeline_mode = #tpu.pipeline_mode<synchronous>, transform_indices = @transform_4, window_bounds = array<i64: 50, 154>}, {pipeline_mode = #tpu.pipeline_mode<synchronous>, transform_indices = @transform_5, window_bounds = array<i64: 1, 154>}, {pipeline_mode = #tpu.pipeline_mode<synchronous>, transform_indices = @transform_6, window_bounds = array<i64: 50, 50>}, {pipeline_mode = #tpu.pipeline_mode<synchronous>, transform_indices = @transform_7, window_bounds = array<i64: 4, 50>}, {pipeline_mode = #tpu.pipeline_mode<synchronous>, transform_indices = @transform_8, window_bounds = array<i64: 50, 154>}, {pipeline_mode = #tpu.pipeline_mode<synchronous>, transform_indices = @transform_9, window_bounds = array<i64: 1, 154>}, {pipeline_mode = #tpu.pipeline_mode<synchronous>, transform_indices = @transform_10, window_bounds = array<i64: 50, 50>}, {pipeline_mode = #tpu.pipeline_mode<synchronous>, transform_indices = @transform_11, window_bounds = array<i64: 4, 50>}, {pipeline_mode = #tpu.pipeline_mode<synchronous>, transform_indices = @transform_12, window_bounds = array<i64: 50, 154>}, {pipeline_mode = #tpu.pipeline_mode<synchronous>, transform_indices = @transform_13, window_bounds = array<i64: 1, 154>}, {pipeline_mode = #tpu.pipeline_mode<synchronous>, transform_indices = @transform_14, window_bounds = array<i64: 50, 50>}, {pipeline_mode = #tpu.pipeline_mode<synchronous>, transform_indices = @transform_15, window_bounds = array<i64: 4, 50>}, {pipeline_mode = #tpu.pipeline_mode<synchronous>, transform_indices = @transform_16, window_bounds = array<i64: 50, 154>}, {pipeline_mode = #tpu.pipeline_mode<synchronous>, transform_indices = @transform_17, window_bounds = array<i64: 1, 154>}, {pipeline_mode = #tpu.pipeline_mode<synchronous>, transform_indices = @transform_18, window_bounds = array<i64: 50, 50>}, {pipeline_mode = #tpu.pipeline_mode<synchronous>, transform_indices = @transform_19, window_bounds = array<i64: 4, 50>}, {pipeline_mode = #tpu.pipeline_mode<synchronous>, transform_indices = @transform_20, window_bounds = array<i64: 50, 55>}, {pipeline_mode = #tpu.pipeline_mode<synchronous>, transform_indices = @transform_21, window_bounds = array<i64: 1, 55>}, {pipeline_mode = #tpu.pipeline_mode<synchronous>, transform_indices = @transform_22, window_bounds = array<i64: 50, 1>}, {pipeline_mode = #tpu.pipeline_mode<synchronous>, transform_indices = @transform_23, window_bounds = array<i64: 4, 1>}, {transform_indices = @transform_24, window_bounds = array<i64: 8, 1>}]} {
    %c0 = arith.constant 0 : index
    %c0_0 = arith.constant 0 : index
    %0 = vector.load %arg1[%c0, %c0_0] : memref<8x8xf32, #tpu.memory_space<vmem>>, vector<8x8xf32>
    %1 = vector.extract_strided_slice %0 {offsets = [0, 0], sizes = [8, 4], strides = [1, 1]} : vector<8x8xf32> to vector<8x4xf32>
    %2 = vector.extract_strided_slice %0 {offsets = [0, 4], sizes = [8, 4], strides = [1, 1]} : vector<8x8xf32> to vector<8x4xf32>
    %c0_1 = arith.constant 0 : index
    %c0_2 = arith.constant 0 : index
    %3 = vector.load %arg2[%c0_1, %c0_2] : memref<4x104xf32, #tpu.memory_space<vmem>>, vector<4x104xf32>
    %cst = arith.constant dense<0.000000e+00> : vector<8x104xf32>
    %4 = tpu.matmul %1, %3, %cst {dimension_numbers = #tpu.dot_dimension_numbers<[1], [0], [0], [1], [0, 0, 1, 1], [], []>} : vector<8x4xf32>, vector<4x104xf32>, vector<8x104xf32> -> vector<8x104xf32>
    %c0_3 = arith.constant 0 : index
    %c0_4 = arith.constant 0 : index
    %5 = vector.load %arg3[%c0_3, %c0_4] : memref<1x104xf32, #tpu.memory_space<vmem>>, vector<1x104xf32>
    %6 = vector.broadcast %5 : vector<1x104xf32> to vector<8x104xf32>
    %7 = arith.addf %4, %6 : vector<8x104xf32>
    %8 = vector.extract_strided_slice %7 {offsets = [0, 0], sizes = [8, 4], strides = [1, 1]} : vector<8x104xf32> to vector<8x4xf32>
    %9 = vector.extract_strided_slice %7 {offsets = [0, 4], sizes = [8, 50], strides = [1, 1]} : vector<8x104xf32> to vector<8x50xf32>
    %10 = vector.extract_strided_slice %7 {offsets = [0, 54], sizes = [8, 50], strides = [1, 1]} : vector<8x104xf32> to vector<8x50xf32>
    %11 = arith.mulf %2, %8 : vector<8x4xf32>
    %c0_5 = arith.constant 0 : index
    %c0_6 = arith.constant 0 : index
    %12 = vector.load %arg4[%c0_5, %c0_6] : memref<4x50xf32, #tpu.memory_space<vmem>>, vector<4x50xf32>
    %cst_7 = arith.constant dense<0.000000e+00> : vector<8x50xf32>
    %13 = tpu.matmul %11, %12, %cst_7 {dimension_numbers = #tpu.dot_dimension_numbers<[1], [0], [0], [1], [0, 0, 1, 1], [], []>} : vector<8x4xf32>, vector<4x50xf32>, vector<8x50xf32> -> vector<8x50xf32>
    %14 = arith.addf %9, %13 : vector<8x50xf32>
    %cst_8 = arith.constant 2.000000e+01 : f32
    %15 = vector.broadcast %cst_8 : f32 to vector<8x50xf32>
    %16 = arith.cmpf ogt, %14, %15 : vector<8x50xf32>
    %cst_9 = arith.constant 2.000000e+01 : f32
    %17 = vector.broadcast %cst_9 : f32 to vector<8x50xf32>
    %18 = arith.minimumf %14, %17 : vector<8x50xf32>
    %19 = math.exp %18 : vector<8x50xf32>
    %20 = math.log1p %19 : vector<8x50xf32>
    %21 = arith.select %16, %14, %20 : vector<8x50xi1>, vector<8x50xf32>
    %cst_10 = arith.constant 2.000000e+01 : f32
    %22 = vector.broadcast %cst_10 : f32 to vector<8x50xf32>
    %23 = arith.cmpf ogt, %10, %22 : vector<8x50xf32>
    %cst_11 = arith.constant 2.000000e+01 : f32
    %24 = vector.broadcast %cst_11 : f32 to vector<8x50xf32>
    %25 = arith.minimumf %10, %24 : vector<8x50xf32>
    %26 = math.exp %25 : vector<8x50xf32>
    %27 = math.log1p %26 : vector<8x50xf32>
    %28 = arith.select %23, %10, %27 : vector<8x50xi1>, vector<8x50xf32>
    %c0_12 = arith.constant 0 : index
    %c0_13 = arith.constant 0 : index
    %29 = vector.load %arg5[%c0_12, %c0_13] : memref<50x154xf32, #tpu.memory_space<vmem>>, vector<50x154xf32>
    %cst_14 = arith.constant dense<0.000000e+00> : vector<8x154xf32>
    %30 = tpu.matmul %28, %29, %cst_14 {dimension_numbers = #tpu.dot_dimension_numbers<[1], [0], [0], [1], [0, 0, 1, 1], [], []>} : vector<8x50xf32>, vector<50x154xf32>, vector<8x154xf32> -> vector<8x154xf32>
    %c0_15 = arith.constant 0 : index
    %c0_16 = arith.constant 0 : index
    %31 = vector.load %arg6[%c0_15, %c0_16] : memref<1x154xf32, #tpu.memory_space<vmem>>, vector<1x154xf32>
    %32 = vector.broadcast %31 : vector<1x154xf32> to vector<8x154xf32>
    %33 = arith.addf %30, %32 : vector<8x154xf32>
    %34 = vector.extract_strided_slice %33 {offsets = [0, 0], sizes = [8, 50], strides = [1, 1]} : vector<8x154xf32> to vector<8x50xf32>
    %35 = vector.extract_strided_slice %33 {offsets = [0, 50], sizes = [8, 50], strides = [1, 1]} : vector<8x154xf32> to vector<8x50xf32>
    %cst_17 = arith.constant 2.000000e+01 : f32
    %36 = vector.broadcast %cst_17 : f32 to vector<8x50xf32>
    %37 = arith.cmpf ogt, %35, %36 : vector<8x50xf32>
    %cst_18 = arith.constant 2.000000e+01 : f32
    %38 = vector.broadcast %cst_18 : f32 to vector<8x50xf32>
    %39 = arith.minimumf %35, %38 : vector<8x50xf32>
    %40 = math.exp %39 : vector<8x50xf32>
    %41 = math.log1p %40 : vector<8x50xf32>
    %42 = arith.select %37, %35, %41 : vector<8x50xi1>, vector<8x50xf32>
    %43 = vector.extract_strided_slice %33 {offsets = [0, 100], sizes = [8, 4], strides = [1, 1]} : vector<8x154xf32> to vector<8x4xf32>
    %44 = vector.extract_strided_slice %33 {offsets = [0, 104], sizes = [8, 50], strides = [1, 1]} : vector<8x154xf32> to vector<8x50xf32>
    %45 = arith.mulf %21, %42 : vector<8x50xf32>
    %c0_19 = arith.constant 0 : index
    %c0_20 = arith.constant 0 : index
    %46 = vector.load %arg7[%c0_19, %c0_20] : memref<50x50xf32, #tpu.memory_space<vmem>>, vector<50x50xf32>
    %cst_21 = arith.constant dense<0.000000e+00> : vector<8x50xf32>
    %47 = tpu.matmul %45, %46, %cst_21 {dimension_numbers = #tpu.dot_dimension_numbers<[1], [0], [0], [1], [0, 0, 1, 1], [], []>} : vector<8x50xf32>, vector<50x50xf32>, vector<8x50xf32> -> vector<8x50xf32>
    %48 = arith.addf %34, %47 : vector<8x50xf32>
    %49 = arith.mulf %2, %43 : vector<8x4xf32>
    %c0_22 = arith.constant 0 : index
    %c0_23 = arith.constant 0 : index
    %50 = vector.load %arg8[%c0_22, %c0_23] : memref<4x50xf32, #tpu.memory_space<vmem>>, vector<4x50xf32>
    %cst_24 = arith.constant dense<0.000000e+00> : vector<8x50xf32>
    %51 = tpu.matmul %49, %50, %cst_24 {dimension_numbers = #tpu.dot_dimension_numbers<[1], [0], [0], [1], [0, 0, 1, 1], [], []>} : vector<8x4xf32>, vector<4x50xf32>, vector<8x50xf32> -> vector<8x50xf32>
    %52 = arith.addf %48, %51 : vector<8x50xf32>
    %cst_25 = arith.constant 2.000000e+01 : f32
    %53 = vector.broadcast %cst_25 : f32 to vector<8x50xf32>
    %54 = arith.cmpf ogt, %52, %53 : vector<8x50xf32>
    %cst_26 = arith.constant 2.000000e+01 : f32
    %55 = vector.broadcast %cst_26 : f32 to vector<8x50xf32>
    %56 = arith.minimumf %52, %55 : vector<8x50xf32>
    %57 = math.exp %56 : vector<8x50xf32>
    %58 = math.log1p %57 : vector<8x50xf32>
    %59 = arith.select %54, %52, %58 : vector<8x50xi1>, vector<8x50xf32>
    %cst_27 = arith.constant 2.000000e+01 : f32
    %60 = vector.broadcast %cst_27 : f32 to vector<8x50xf32>
    %61 = arith.cmpf ogt, %44, %60 : vector<8x50xf32>
    %cst_28 = arith.constant 2.000000e+01 : f32
    %62 = vector.broadcast %cst_28 : f32 to vector<8x50xf32>
    %63 = arith.minimumf %44, %62 : vector<8x50xf32>
    %64 = math.exp %63 : vector<8x50xf32>
    %65 = math.log1p %64 : vector<8x50xf32>
    %66 = arith.select %61, %44, %65 : vector<8x50xi1>, vector<8x50xf32>
    %c0_29 = arith.constant 0 : index
    %c0_30 = arith.constant 0 : index
    %67 = vector.load %arg9[%c0_29, %c0_30] : memref<50x154xf32, #tpu.memory_space<vmem>>, vector<50x154xf32>
    %cst_31 = arith.constant dense<0.000000e+00> : vector<8x154xf32>
    %68 = tpu.matmul %66, %67, %cst_31 {dimension_numbers = #tpu.dot_dimension_numbers<[1], [0], [0], [1], [0, 0, 1, 1], [], []>} : vector<8x50xf32>, vector<50x154xf32>, vector<8x154xf32> -> vector<8x154xf32>
    %c0_32 = arith.constant 0 : index
    %c0_33 = arith.constant 0 : index
    %69 = vector.load %arg10[%c0_32, %c0_33] : memref<1x154xf32, #tpu.memory_space<vmem>>, vector<1x154xf32>
    %70 = vector.broadcast %69 : vector<1x154xf32> to vector<8x154xf32>
    %71 = arith.addf %68, %70 : vector<8x154xf32>
    %72 = vector.extract_strided_slice %71 {offsets = [0, 0], sizes = [8, 50], strides = [1, 1]} : vector<8x154xf32> to vector<8x50xf32>
    %73 = vector.extract_strided_slice %71 {offsets = [0, 50], sizes = [8, 50], strides = [1, 1]} : vector<8x154xf32> to vector<8x50xf32>
    %cst_34 = arith.constant 2.000000e+01 : f32
    %74 = vector.broadcast %cst_34 : f32 to vector<8x50xf32>
    %75 = arith.cmpf ogt, %73, %74 : vector<8x50xf32>
    %cst_35 = arith.constant 2.000000e+01 : f32
    %76 = vector.broadcast %cst_35 : f32 to vector<8x50xf32>
    %77 = arith.minimumf %73, %76 : vector<8x50xf32>
    %78 = math.exp %77 : vector<8x50xf32>
    %79 = math.log1p %78 : vector<8x50xf32>
    %80 = arith.select %75, %73, %79 : vector<8x50xi1>, vector<8x50xf32>
    %81 = vector.extract_strided_slice %71 {offsets = [0, 100], sizes = [8, 4], strides = [1, 1]} : vector<8x154xf32> to vector<8x4xf32>
    %82 = vector.extract_strided_slice %71 {offsets = [0, 104], sizes = [8, 50], strides = [1, 1]} : vector<8x154xf32> to vector<8x50xf32>
    %83 = arith.mulf %59, %80 : vector<8x50xf32>
    %c0_36 = arith.constant 0 : index
    %c0_37 = arith.constant 0 : index
    %84 = vector.load %arg11[%c0_36, %c0_37] : memref<50x50xf32, #tpu.memory_space<vmem>>, vector<50x50xf32>
    %cst_38 = arith.constant dense<0.000000e+00> : vector<8x50xf32>
    %85 = tpu.matmul %83, %84, %cst_38 {dimension_numbers = #tpu.dot_dimension_numbers<[1], [0], [0], [1], [0, 0, 1, 1], [], []>} : vector<8x50xf32>, vector<50x50xf32>, vector<8x50xf32> -> vector<8x50xf32>
    %86 = arith.addf %72, %85 : vector<8x50xf32>
    %87 = arith.mulf %2, %81 : vector<8x4xf32>
    %c0_39 = arith.constant 0 : index
    %c0_40 = arith.constant 0 : index
    %88 = vector.load %arg12[%c0_39, %c0_40] : memref<4x50xf32, #tpu.memory_space<vmem>>, vector<4x50xf32>
    %cst_41 = arith.constant dense<0.000000e+00> : vector<8x50xf32>
    %89 = tpu.matmul %87, %88, %cst_41 {dimension_numbers = #tpu.dot_dimension_numbers<[1], [0], [0], [1], [0, 0, 1, 1], [], []>} : vector<8x4xf32>, vector<4x50xf32>, vector<8x50xf32> -> vector<8x50xf32>
    %90 = arith.addf %86, %89 : vector<8x50xf32>
    %cst_42 = arith.constant 2.000000e+01 : f32
    %91 = vector.broadcast %cst_42 : f32 to vector<8x50xf32>
    %92 = arith.cmpf ogt, %90, %91 : vector<8x50xf32>
    %cst_43 = arith.constant 2.000000e+01 : f32
    %93 = vector.broadcast %cst_43 : f32 to vector<8x50xf32>
    %94 = arith.minimumf %90, %93 : vector<8x50xf32>
    %95 = math.exp %94 : vector<8x50xf32>
    %96 = math.log1p %95 : vector<8x50xf32>
    %97 = arith.select %92, %90, %96 : vector<8x50xi1>, vector<8x50xf32>
    %cst_44 = arith.constant 2.000000e+01 : f32
    %98 = vector.broadcast %cst_44 : f32 to vector<8x50xf32>
    %99 = arith.cmpf ogt, %82, %98 : vector<8x50xf32>
    %cst_45 = arith.constant 2.000000e+01 : f32
    %100 = vector.broadcast %cst_45 : f32 to vector<8x50xf32>
    %101 = arith.minimumf %82, %100 : vector<8x50xf32>
    %102 = math.exp %101 : vector<8x50xf32>
    %103 = math.log1p %102 : vector<8x50xf32>
    %104 = arith.select %99, %82, %103 : vector<8x50xi1>, vector<8x50xf32>
    %c0_46 = arith.constant 0 : index
    %c0_47 = arith.constant 0 : index
    %105 = vector.load %arg13[%c0_46, %c0_47] : memref<50x154xf32, #tpu.memory_space<vmem>>, vector<50x154xf32>
    %cst_48 = arith.constant dense<0.000000e+00> : vector<8x154xf32>
    %106 = tpu.matmul %104, %105, %cst_48 {dimension_numbers = #tpu.dot_dimension_numbers<[1], [0], [0], [1], [0, 0, 1, 1], [], []>} : vector<8x50xf32>, vector<50x154xf32>, vector<8x154xf32> -> vector<8x154xf32>
    %c0_49 = arith.constant 0 : index
    %c0_50 = arith.constant 0 : index
    %107 = vector.load %arg14[%c0_49, %c0_50] : memref<1x154xf32, #tpu.memory_space<vmem>>, vector<1x154xf32>
    %108 = vector.broadcast %107 : vector<1x154xf32> to vector<8x154xf32>
    %109 = arith.addf %106, %108 : vector<8x154xf32>
    %110 = vector.extract_strided_slice %109 {offsets = [0, 0], sizes = [8, 50], strides = [1, 1]} : vector<8x154xf32> to vector<8x50xf32>
    %111 = vector.extract_strided_slice %109 {offsets = [0, 50], sizes = [8, 50], strides = [1, 1]} : vector<8x154xf32> to vector<8x50xf32>
    %cst_51 = arith.constant 2.000000e+01 : f32
    %112 = vector.broadcast %cst_51 : f32 to vector<8x50xf32>
    %113 = arith.cmpf ogt, %111, %112 : vector<8x50xf32>
    %cst_52 = arith.constant 2.000000e+01 : f32
    %114 = vector.broadcast %cst_52 : f32 to vector<8x50xf32>
    %115 = arith.minimumf %111, %114 : vector<8x50xf32>
    %116 = math.exp %115 : vector<8x50xf32>
    %117 = math.log1p %116 : vector<8x50xf32>
    %118 = arith.select %113, %111, %117 : vector<8x50xi1>, vector<8x50xf32>
    %119 = vector.extract_strided_slice %109 {offsets = [0, 100], sizes = [8, 4], strides = [1, 1]} : vector<8x154xf32> to vector<8x4xf32>
    %120 = vector.extract_strided_slice %109 {offsets = [0, 104], sizes = [8, 50], strides = [1, 1]} : vector<8x154xf32> to vector<8x50xf32>
    %121 = arith.mulf %97, %118 : vector<8x50xf32>
    %c0_53 = arith.constant 0 : index
    %c0_54 = arith.constant 0 : index
    %122 = vector.load %arg15[%c0_53, %c0_54] : memref<50x50xf32, #tpu.memory_space<vmem>>, vector<50x50xf32>
    %cst_55 = arith.constant dense<0.000000e+00> : vector<8x50xf32>
    %123 = tpu.matmul %121, %122, %cst_55 {dimension_numbers = #tpu.dot_dimension_numbers<[1], [0], [0], [1], [0, 0, 1, 1], [], []>} : vector<8x50xf32>, vector<50x50xf32>, vector<8x50xf32> -> vector<8x50xf32>
    %124 = arith.addf %110, %123 : vector<8x50xf32>
    %125 = arith.mulf %2, %119 : vector<8x4xf32>
    %c0_56 = arith.constant 0 : index
    %c0_57 = arith.constant 0 : index
    %126 = vector.load %arg16[%c0_56, %c0_57] : memref<4x50xf32, #tpu.memory_space<vmem>>, vector<4x50xf32>
    %cst_58 = arith.constant dense<0.000000e+00> : vector<8x50xf32>
    %127 = tpu.matmul %125, %126, %cst_58 {dimension_numbers = #tpu.dot_dimension_numbers<[1], [0], [0], [1], [0, 0, 1, 1], [], []>} : vector<8x4xf32>, vector<4x50xf32>, vector<8x50xf32> -> vector<8x50xf32>
    %128 = arith.addf %124, %127 : vector<8x50xf32>
    %cst_59 = arith.constant 2.000000e+01 : f32
    %129 = vector.broadcast %cst_59 : f32 to vector<8x50xf32>
    %130 = arith.cmpf ogt, %128, %129 : vector<8x50xf32>
    %cst_60 = arith.constant 2.000000e+01 : f32
    %131 = vector.broadcast %cst_60 : f32 to vector<8x50xf32>
    %132 = arith.minimumf %128, %131 : vector<8x50xf32>
    %133 = math.exp %132 : vector<8x50xf32>
    %134 = math.log1p %133 : vector<8x50xf32>
    %135 = arith.select %130, %128, %134 : vector<8x50xi1>, vector<8x50xf32>
    %cst_61 = arith.constant 2.000000e+01 : f32
    %136 = vector.broadcast %cst_61 : f32 to vector<8x50xf32>
    %137 = arith.cmpf ogt, %120, %136 : vector<8x50xf32>
    %cst_62 = arith.constant 2.000000e+01 : f32
    %138 = vector.broadcast %cst_62 : f32 to vector<8x50xf32>
    %139 = arith.minimumf %120, %138 : vector<8x50xf32>
    %140 = math.exp %139 : vector<8x50xf32>
    %141 = math.log1p %140 : vector<8x50xf32>
    %142 = arith.select %137, %120, %141 : vector<8x50xi1>, vector<8x50xf32>
    %c0_63 = arith.constant 0 : index
    %c0_64 = arith.constant 0 : index
    %143 = vector.load %arg17[%c0_63, %c0_64] : memref<50x154xf32, #tpu.memory_space<vmem>>, vector<50x154xf32>
    %cst_65 = arith.constant dense<0.000000e+00> : vector<8x154xf32>
    %144 = tpu.matmul %142, %143, %cst_65 {dimension_numbers = #tpu.dot_dimension_numbers<[1], [0], [0], [1], [0, 0, 1, 1], [], []>} : vector<8x50xf32>, vector<50x154xf32>, vector<8x154xf32> -> vector<8x154xf32>
    %c0_66 = arith.constant 0 : index
    %c0_67 = arith.constant 0 : index
    %145 = vector.load %arg18[%c0_66, %c0_67] : memref<1x154xf32, #tpu.memory_space<vmem>>, vector<1x154xf32>
    %146 = vector.broadcast %145 : vector<1x154xf32> to vector<8x154xf32>
    %147 = arith.addf %144, %146 : vector<8x154xf32>
    %148 = vector.extract_strided_slice %147 {offsets = [0, 0], sizes = [8, 50], strides = [1, 1]} : vector<8x154xf32> to vector<8x50xf32>
    %149 = vector.extract_strided_slice %147 {offsets = [0, 50], sizes = [8, 50], strides = [1, 1]} : vector<8x154xf32> to vector<8x50xf32>
    %cst_68 = arith.constant 2.000000e+01 : f32
    %150 = vector.broadcast %cst_68 : f32 to vector<8x50xf32>
    %151 = arith.cmpf ogt, %149, %150 : vector<8x50xf32>
    %cst_69 = arith.constant 2.000000e+01 : f32
    %152 = vector.broadcast %cst_69 : f32 to vector<8x50xf32>
    %153 = arith.minimumf %149, %152 : vector<8x50xf32>
    %154 = math.exp %153 : vector<8x50xf32>
    %155 = math.log1p %154 : vector<8x50xf32>
    %156 = arith.select %151, %149, %155 : vector<8x50xi1>, vector<8x50xf32>
    %157 = vector.extract_strided_slice %147 {offsets = [0, 100], sizes = [8, 4], strides = [1, 1]} : vector<8x154xf32> to vector<8x4xf32>
    %158 = vector.extract_strided_slice %147 {offsets = [0, 104], sizes = [8, 50], strides = [1, 1]} : vector<8x154xf32> to vector<8x50xf32>
    %159 = arith.mulf %135, %156 : vector<8x50xf32>
    %c0_70 = arith.constant 0 : index
    %c0_71 = arith.constant 0 : index
    %160 = vector.load %arg19[%c0_70, %c0_71] : memref<50x50xf32, #tpu.memory_space<vmem>>, vector<50x50xf32>
    %cst_72 = arith.constant dense<0.000000e+00> : vector<8x50xf32>
    %161 = tpu.matmul %159, %160, %cst_72 {dimension_numbers = #tpu.dot_dimension_numbers<[1], [0], [0], [1], [0, 0, 1, 1], [], []>} : vector<8x50xf32>, vector<50x50xf32>, vector<8x50xf32> -> vector<8x50xf32>
    %162 = arith.addf %148, %161 : vector<8x50xf32>
    %163 = arith.mulf %2, %157 : vector<8x4xf32>
    %c0_73 = arith.constant 0 : index
    %c0_74 = arith.constant 0 : index
    %164 = vector.load %arg20[%c0_73, %c0_74] : memref<4x50xf32, #tpu.memory_space<vmem>>, vector<4x50xf32>
    %cst_75 = arith.constant dense<0.000000e+00> : vector<8x50xf32>
    %165 = tpu.matmul %163, %164, %cst_75 {dimension_numbers = #tpu.dot_dimension_numbers<[1], [0], [0], [1], [0, 0, 1, 1], [], []>} : vector<8x4xf32>, vector<4x50xf32>, vector<8x50xf32> -> vector<8x50xf32>
    %166 = arith.addf %162, %165 : vector<8x50xf32>
    %cst_76 = arith.constant 2.000000e+01 : f32
    %167 = vector.broadcast %cst_76 : f32 to vector<8x50xf32>
    %168 = arith.cmpf ogt, %166, %167 : vector<8x50xf32>
    %cst_77 = arith.constant 2.000000e+01 : f32
    %169 = vector.broadcast %cst_77 : f32 to vector<8x50xf32>
    %170 = arith.minimumf %166, %169 : vector<8x50xf32>
    %171 = math.exp %170 : vector<8x50xf32>
    %172 = math.log1p %171 : vector<8x50xf32>
    %173 = arith.select %168, %166, %172 : vector<8x50xi1>, vector<8x50xf32>
    %cst_78 = arith.constant 2.000000e+01 : f32
    %174 = vector.broadcast %cst_78 : f32 to vector<8x50xf32>
    %175 = arith.cmpf ogt, %158, %174 : vector<8x50xf32>
    %cst_79 = arith.constant 2.000000e+01 : f32
    %176 = vector.broadcast %cst_79 : f32 to vector<8x50xf32>
    %177 = arith.minimumf %158, %176 : vector<8x50xf32>
    %178 = math.exp %177 : vector<8x50xf32>
    %179 = math.log1p %178 : vector<8x50xf32>
    %180 = arith.select %175, %158, %179 : vector<8x50xi1>, vector<8x50xf32>
    %c0_80 = arith.constant 0 : index
    %c0_81 = arith.constant 0 : index
    %181 = vector.load %arg21[%c0_80, %c0_81] : memref<50x55xf32, #tpu.memory_space<vmem>>, vector<50x55xf32>
    %cst_82 = arith.constant dense<0.000000e+00> : vector<8x55xf32>
    %182 = tpu.matmul %180, %181, %cst_82 {dimension_numbers = #tpu.dot_dimension_numbers<[1], [0], [0], [1], [0, 0, 1, 1], [], []>} : vector<8x50xf32>, vector<50x55xf32>, vector<8x55xf32> -> vector<8x55xf32>
    %c0_83 = arith.constant 0 : index
    %c0_84 = arith.constant 0 : index
    %183 = vector.load %arg22[%c0_83, %c0_84] : memref<1x55xf32, #tpu.memory_space<vmem>>, vector<1x55xf32>
    %184 = vector.broadcast %183 : vector<1x55xf32> to vector<8x55xf32>
    %185 = arith.addf %182, %184 : vector<8x55xf32>
    %186 = vector.extract_strided_slice %185 {offsets = [0, 0], sizes = [8, 1], strides = [1, 1]} : vector<8x55xf32> to vector<8x1xf32>
    %187 = vector.extract_strided_slice %185 {offsets = [0, 1], sizes = [8, 50], strides = [1, 1]} : vector<8x55xf32> to vector<8x50xf32>
    %cst_85 = arith.constant 2.000000e+01 : f32
    %188 = vector.broadcast %cst_85 : f32 to vector<8x50xf32>
    %189 = arith.cmpf ogt, %187, %188 : vector<8x50xf32>
    %cst_86 = arith.constant 2.000000e+01 : f32
    %190 = vector.broadcast %cst_86 : f32 to vector<8x50xf32>
    %191 = arith.minimumf %187, %190 : vector<8x50xf32>
    %192 = math.exp %191 : vector<8x50xf32>
    %193 = math.log1p %192 : vector<8x50xf32>
    %194 = arith.select %189, %187, %193 : vector<8x50xi1>, vector<8x50xf32>
    %195 = vector.extract_strided_slice %185 {offsets = [0, 51], sizes = [8, 4], strides = [1, 1]} : vector<8x55xf32> to vector<8x4xf32>
    %196 = arith.mulf %173, %194 : vector<8x50xf32>
    %c0_87 = arith.constant 0 : index
    %c0_88 = arith.constant 0 : index
    %197 = vector.load %arg23[%c0_87, %c0_88] : memref<50x1xf32, #tpu.memory_space<vmem>>, vector<50x1xf32>
    %cst_89 = arith.constant dense<0.000000e+00> : vector<8x1xf32>
    %198 = tpu.matmul %196, %197, %cst_89 {dimension_numbers = #tpu.dot_dimension_numbers<[1], [0], [0], [1], [0, 0, 1, 1], [], []>} : vector<8x50xf32>, vector<50x1xf32>, vector<8x1xf32> -> vector<8x1xf32>
    %199 = arith.addf %186, %198 : vector<8x1xf32>
    %200 = arith.mulf %2, %195 : vector<8x4xf32>
    %c0_90 = arith.constant 0 : index
    %c0_91 = arith.constant 0 : index
    %201 = vector.load %arg24[%c0_90, %c0_91] : memref<4x1xf32, #tpu.memory_space<vmem>>, vector<4x1xf32>
    %cst_92 = arith.constant dense<0.000000e+00> : vector<8x1xf32>
    %202 = tpu.matmul %200, %201, %cst_92 {dimension_numbers = #tpu.dot_dimension_numbers<[1], [0], [0], [1], [0, 0, 1, 1], [], []>} : vector<8x4xf32>, vector<4x1xf32>, vector<8x1xf32> -> vector<8x1xf32>
    %203 = arith.addf %199, %202 : vector<8x1xf32>
    %cst_93 = arith.constant 2.000000e+01 : f32
    %204 = vector.broadcast %cst_93 : f32 to vector<8x1xf32>
    %205 = arith.cmpf ogt, %203, %204 : vector<8x1xf32>
    %cst_94 = arith.constant 2.000000e+01 : f32
    %206 = vector.broadcast %cst_94 : f32 to vector<8x1xf32>
    %207 = arith.minimumf %203, %206 : vector<8x1xf32>
    %208 = math.exp %207 : vector<8x1xf32>
    %209 = math.log1p %208 : vector<8x1xf32>
    %210 = arith.select %205, %203, %209 : vector<8x1xi1>, vector<8x1xf32>
    %c0_95 = arith.constant 0 : index
    %c0_96 = arith.constant 0 : index
    %211 = vector.load %arg25[%c0_95, %c0_96] : memref<8x1xf32, #tpu.memory_space<vmem>>, vector<8x1xf32>
    tpu.vector_store %arg25[%c0_95, %c0_96], %210 {strides = array<i32>} : memref<8x1xf32, #tpu.memory_space<vmem>>, vector<8x1xf32>,
    return
  }
  func.func @transform_0(%arg0: i32) -> (i32, i32) {
    %c0_i32 = arith.constant 0 : i32
    %c0_i32_0 = arith.constant 0 : i32
    return %arg0, %c0_i32 : i32, i32
  }
  func.func @transform_1(%arg0: i32) -> (i32, i32) {
    %c0_i32 = arith.constant 0 : i32
    %c0_i32_0 = arith.constant 0 : i32
    %c0_i32_1 = arith.constant 0 : i32
    return %c0_i32, %c0_i32_0 : i32, i32
  }
  func.func @transform_2(%arg0: i32) -> (i32, i32) {
    %c0_i32 = arith.constant 0 : i32
    %c0_i32_0 = arith.constant 0 : i32
    %c0_i32_1 = arith.constant 0 : i32
    return %c0_i32, %c0_i32_0 : i32, i32
  }
  func.func @transform_3(%arg0: i32) -> (i32, i32) {
    %c0_i32 = arith.constant 0 : i32
    %c0_i32_0 = arith.constant 0 : i32
    %c0_i32_1 = arith.constant 0 : i32
    return %c0_i32, %c0_i32_0 : i32, i32
  }
  func.func @transform_4(%arg0: i32) -> (i32, i32) {
    %c0_i32 = arith.constant 0 : i32
    %c0_i32_0 = arith.constant 0 : i32
    %c0_i32_1 = arith.constant 0 : i32
    return %c0_i32, %c0_i32_0 : i32, i32
  }
  func.func @transform_5(%arg0: i32) -> (i32, i32) {
    %c0_i32 = arith.constant 0 : i32
    %c0_i32_0 = arith.constant 0 : i32
    %c0_i32_1 = arith.constant 0 : i32
    return %c0_i32, %c0_i32_0 : i32, i32
  }
  func.func @transform_6(%arg0: i32) -> (i32, i32) {
    %c0_i32 = arith.constant 0 : i32
    %c0_i32_0 = arith.constant 0 : i32
    %c0_i32_1 = arith.constant 0 : i32
    return %c0_i32, %c0_i32_0 : i32, i32
  }
  func.func @transform_7(%arg0: i32) -> (i32, i32) {
    %c0_i32 = arith.constant 0 : i32
    %c0_i32_0 = arith.constant 0 : i32
    %c0_i32_1 = arith.constant 0 : i32
    return %c0_i32, %c0_i32_0 : i32, i32
  }
  func.func @transform_8(%arg0: i32) -> (i32, i32) {
    %c0_i32 = arith.constant 0 : i32
    %c0_i32_0 = arith.constant 0 : i32
    %c0_i32_1 = arith.constant 0 : i32
    return %c0_i32, %c0_i32_0 : i32, i32
  }
  func.func @transform_9(%arg0: i32) -> (i32, i32) {
    %c0_i32 = arith.constant 0 : i32
    %c0_i32_0 = arith.constant 0 : i32
    %c0_i32_1 = arith.constant 0 : i32
    return %c0_i32, %c0_i32_0 : i32, i32
  }
  func.func @transform_10(%arg0: i32) -> (i32, i32) {
    %c0_i32 = arith.constant 0 : i32
    %c0_i32_0 = arith.constant 0 : i32
    %c0_i32_1 = arith.constant 0 : i32
    return %c0_i32, %c0_i32_0 : i32, i32
  }
  func.func @transform_11(%arg0: i32) -> (i32, i32) {
    %c0_i32 = arith.constant 0 : i32
    %c0_i32_0 = arith.constant 0 : i32
    %c0_i32_1 = arith.constant 0 : i32
    return %c0_i32, %c0_i32_0 : i32, i32
  }
  func.func @transform_12(%arg0: i32) -> (i32, i32) {
    %c0_i32 = arith.constant 0 : i32
    %c0_i32_0 = arith.constant 0 : i32
    %c0_i32_1 = arith.constant 0 : i32
    return %c0_i32, %c0_i32_0 : i32, i32
  }
  func.func @transform_13(%arg0: i32) -> (i32, i32) {
    %c0_i32 = arith.constant 0 : i32
    %c0_i32_0 = arith.constant 0 : i32
    %c0_i32_1 = arith.constant 0 : i32
    return %c0_i32, %c0_i32_0 : i32, i32
  }
  func.func @transform_14(%arg0: i32) -> (i32, i32) {
    %c0_i32 = arith.constant 0 : i32
    %c0_i32_0 = arith.constant 0 : i32
    %c0_i32_1 = arith.constant 0 : i32
    return %c0_i32, %c0_i32_0 : i32, i32
  }
  func.func @transform_15(%arg0: i32) -> (i32, i32) {
    %c0_i32 = arith.constant 0 : i32
    %c0_i32_0 = arith.constant 0 : i32
    %c0_i32_1 = arith.constant 0 : i32
    return %c0_i32, %c0_i32_0 : i32, i32
  }
  func.func @transform_16(%arg0: i32) -> (i32, i32) {
    %c0_i32 = arith.constant 0 : i32
    %c0_i32_0 = arith.constant 0 : i32
    %c0_i32_1 = arith.constant 0 : i32
    return %c0_i32, %c0_i32_0 : i32, i32
  }
  func.func @transform_17(%arg0: i32) -> (i32, i32) {
    %c0_i32 = arith.constant 0 : i32
    %c0_i32_0 = arith.constant 0 : i32
    %c0_i32_1 = arith.constant 0 : i32
    return %c0_i32, %c0_i32_0 : i32, i32
  }
  func.func @transform_18(%arg0: i32) -> (i32, i32) {
    %c0_i32 = arith.constant 0 : i32
    %c0_i32_0 = arith.constant 0 : i32
    %c0_i32_1 = arith.constant 0 : i32
    return %c0_i32, %c0_i32_0 : i32, i32
  }
  func.func @transform_19(%arg0: i32) -> (i32, i32) {
    %c0_i32 = arith.constant 0 : i32
    %c0_i32_0 = arith.constant 0 : i32
    %c0_i32_1 = arith.constant 0 : i32
    return %c0_i32, %c0_i32_0 : i32, i32
  }
  func.func @transform_20(%arg0: i32) -> (i32, i32) {
    %c0_i32 = arith.constant 0 : i32
    %c0_i32_0 = arith.constant 0 : i32
    %c0_i32_1 = arith.constant 0 : i32
    return %c0_i32, %c0_i32_0 : i32, i32
  }
  func.func @transform_21(%arg0: i32) -> (i32, i32) {
    %c0_i32 = arith.constant 0 : i32
    %c0_i32_0 = arith.constant 0 : i32
    %c0_i32_1 = arith.constant 0 : i32
    return %c0_i32, %c0_i32_0 : i32, i32
  }
  func.func @transform_22(%arg0: i32) -> (i32, i32) {
    %c0_i32 = arith.constant 0 : i32
    %c0_i32_0 = arith.constant 0 : i32
    %c0_i32_1 = arith.constant 0 : i32
    return %c0_i32, %c0_i32_0 : i32, i32
  }
  func.func @transform_23(%arg0: i32) -> (i32, i32) {
    %c0_i32 = arith.constant 0 : i32
    %c0_i32_0 = arith.constant 0 : i32
    %c0_i32_1 = arith.constant 0 : i32
    return %c0_i32, %c0_i32_0 : i32, i32
  }
  func.func @transform_24(%arg0: i32) -> (i32, i32) {
    %c0_i32 = arith.constant 0 : i32
    %c0_i32_0 = arith.constant 0 : i32
    return %arg0, %c0_i32 : i32, i32
  }
}

</mosaic_0001>

<llo_original>
// kernel: tpu_custom_call.1
$region0: #{tpu_custom_call.1}
  #allocation0 [shape = 'u32[]', space=smem, size = 0x4, offset = 0x4, fixed_abs, tag = 'smem constant byte address 0x4 - core index']
  #allocation1 [shape = 'u32[144,128]{1,0:T(1,128)}', space=vmem, size = 0x12000, scoped, tag = 'internal scratch']
  %s0 = inlined_call_operand.vmem [shape: f32[8,8], index: 0, kind: input, shape index: {}]
  %s1 = inlined_call_operand.vmem [shape: f32[4,104], index: 1, kind: input, shape index: {}]
  %s2 = inlined_call_operand.hbm [shape: f32[1,104], index: 2, kind: input, shape index: {}]
  %s3 = inlined_call_operand.vmem [shape: f32[4,50], index: 3, kind: input, shape index: {}]
  %s4 = inlined_call_operand.hbm [shape: f32[50,154], index: 4, kind: input, shape index: {}]
  %s5 = inlined_call_operand.hbm [shape: f32[1,154], index: 5, kind: input, shape index: {}]
  %s6 = inlined_call_operand.vmem [shape: f32[50,50], index: 6, kind: input, shape index: {}]
  %s7 = inlined_call_operand.hbm [shape: f32[4,50], index: 7, kind: input, shape index: {}]
  %s8 = inlined_call_operand.hbm [shape: f32[50,154], index: 8, kind: input, shape index: {}]
  %s9 = inlined_call_operand.hbm [shape: f32[1,154], index: 9, kind: input, shape index: {}]
  %s10 = inlined_call_operand.hbm [shape: f32[50,50], index: 10, kind: input, shape index: {}]
  %s11 = inlined_call_operand.vmem [shape: f32[4,50], index: 11, kind: input, shape index: {}]
  %s12 = inlined_call_operand.hbm [shape: f32[50,154], index: 12, kind: input, shape index: {}]
  %s13 = inlined_call_operand.hbm [shape: f32[1,154], index: 13, kind: input, shape index: {}]
  %s14 = inlined_call_operand.hbm [shape: f32[50,50], index: 14, kind: input, shape index: {}]
  %s15 = inlined_call_operand.vmem [shape: f32[4,50], index: 15, kind: input, shape index: {}]
  %s16 = inlined_call_operand.hbm [shape: f32[50,154], index: 16, kind: input, shape index: {}]
  %s17 = inlined_call_operand.vmem [shape: f32[1,154], index: 17, kind: input, shape index: {}]
  %s18 = inlined_call_operand.hbm [shape: f32[50,50], index: 18, kind: input, shape index: {}]
  %s19 = inlined_call_operand.vmem [shape: f32[4,50], index: 19, kind: input, shape index: {}]
  %s20 = inlined_call_operand.hbm [shape: f32[50,55], index: 20, kind: input, shape index: {}]
  %s21 = inlined_call_operand.vmem [shape: f32[1,55], index: 21, kind: input, shape index: {}]
  %s22 = inlined_call_operand.vmem [shape: f32[50,1], index: 22, kind: input, shape index: {}]
  %s23 = inlined_call_operand.vmem [shape: f32[4,1], index: 23, kind: input, shape index: {}]
  %s24 = inlined_call_operand.vmem [shape: f32[8,1], index: 24, kind: output, shape index: {}]
  %s25 = sld [smem:[#allocation0]]
  $region158: #{tpu_custom_call.1} parent=0
    _
  %s27 = ssub.s32 1, %s25
  %s28 = scalar_select 0, %s27, %s25
  $region1: #{tpu_custom_call.1} parent=0
    #allocation2 [shape = 'u8[512]{0}', space=vmem, size = 0x400, scoped, tag = 'input window, operand 2, single buffered']
    #allocation3 [shape = 's32[1]{0}', space=sflag, size = 0x4, scoped, tag = 'scoped memory for tpu_custom_call.1']
    #allocation4 [shape = 'u8[57344]{0}', space=vmem, size = 0xe000, scoped, tag = 'input window, operand 4, single buffered']
    #allocation5 [shape = 's32[1]{0}', space=sflag, size = 0x4, scoped, tag = 'scoped memory for tpu_custom_call.1']
    #allocation6 [shape = 'u8[1024]{0}', space=vmem, size = 0x400, scoped, tag = 'input window, operand 5, single buffered']
    #allocation7 [shape = 'u8[2048]{0}', space=vmem, size = 0x800, scoped, tag = 'input window, operand 7, single buffered']
    #allocation8 [shape = 's32[1]{0}', space=sflag, size = 0x4, scoped, tag = 'scoped memory for tpu_custom_call.1']
    #allocation9 [shape = 'u8[57344]{0}', space=vmem, size = 0xe000, scoped, tag = 'input window, operand 8, single buffered']
    #allocation10 [shape = 'u8[1024]{0}', space=vmem, size = 0x400, scoped, tag = 'input window, operand 9, single buffered']
    #allocation11 [shape = 's32[1]{0}', space=sflag, size = 0x4, scoped, tag = 'scoped memory for tpu_custom_call.1']
    #allocation12 [shape = 'u8[28672]{0}', space=vmem, size = 0x7000, scoped, tag = 'input window, operand 10, single buffered']
    #allocation13 [shape = 'u8[57344]{0}', space=vmem, size = 0xe000, scoped, tag = 'input window, operand 12, single buffered']
    #allocation14 [shape = 's32[1]{0}', space=sflag, size = 0x4, scoped, tag = 'scoped memory for tpu_custom_call.1']
    #allocation15 [shape = 'u8[1024]{0}', space=vmem, size = 0x400, scoped, tag = 'input window, operand 13, single buffered']
    #allocation16 [shape = 'u8[28672]{0}', space=vmem, size = 0x7000, scoped, tag = 'input window, operand 14, single buffered']
    #allocation17 [shape = 's32[1]{0}', space=sflag, size = 0x4, scoped, tag = 'scoped memory for tpu_custom_call.1']
    #allocation18 [shape = 'u8[57344]{0}', space=vmem, size = 0xe000, scoped, tag = 'input window, operand 16, single buffered']
    #allocation19 [shape = 'u8[28672]{0}', space=vmem, size = 0x7000, scoped, tag = 'input window, operand 18, single buffered']
    #allocation20 [shape = 's32[1]{0}', space=sflag, size = 0x4, scoped, tag = 'scoped memory for tpu_custom_call.1']
    #allocation21 [shape = 'u8[28672]{0}', space=vmem, size = 0x7000, scoped, tag = 'input window, operand 20, single buffered']
    %29 = vsyncpa [#allocation3], 0
    %30 = vsyncpa [#allocation5], 0
    %31 = vsyncpa [#allocation8], 0
    %32 = vsyncpa [#allocation11], 0
    %33 = vsyncpa [#allocation14], 0
    %34 = vsyncpa [#allocation17], 0
    %35 = vsyncpa [#allocation20], 0
    // Predicated region
    $region2: #{tpu_custom_call.1} parent=1 // pred_check
      _
    $region3: #{tpu_custom_call.1} parent=1 // pred_check_branch
      %37 = sbr.rel (0) target = $region5
    $region4: #{tpu_custom_call.1} parent=1 // pred_region
      _
    $region5: #{tpu_custom_call.1} parent=1 // pred_fallthru
      _
    // Predicated region
    $region6: #{tpu_custom_call.1} parent=1 // pred_check
      _
    $region7: #{tpu_custom_call.1} parent=1 // pred_check_branch
      %39 = sbr.rel (0) target = $region9
    $region8: #{tpu_custom_call.1} parent=1 // pred_region
      _
    $region9: #{tpu_custom_call.1} parent=1 // pred_fallthru
      _
    // Predicated region
    $region10: #{tpu_custom_call.1} parent=1 // pred_check
      _
    $region11: #{tpu_custom_call.1} parent=1 // pred_check_branch
      %41 = sbr.rel (0) target = $region13
    $region12: #{tpu_custom_call.1} parent=1 // pred_region
      %s43 = ssub.s32 16, 16
      %44 = vsyncadd [#allocation3], %s43
      %s46 = sshll.u32 [#allocation2], 4
      %s47 = int_to_ptr.vmem [resolvable:$true] %s46
      %49 = dma.hbm_to_vmem [thread:$0]  %s2, 16, %s47, [#allocation3]
    $region13: #{tpu_custom_call.1} parent=1 // pred_fallthru
      _
    // Predicated region
    $region14: #{tpu_custom_call.1} parent=1 // pred_check
      _
    $region15: #{tpu_custom_call.1} parent=1 // pred_check_branch
      %51 = sbr.rel (0) target = $region17
    $region16: #{tpu_custom_call.1} parent=1 // pred_region
      _
    $region17: #{tpu_custom_call.1} parent=1 // pred_fallthru
      _
    // Predicated region
    $region18: #{tpu_custom_call.1} parent=1 // pred_check
      _
    $region19: #{tpu_custom_call.1} parent=1 // pred_check_branch
      %53 = sbr.rel (0) target = $region21
    $region20: #{tpu_custom_call.1} parent=1 // pred_region
      %s55 = ssub.s32 1792, 1792
      %56 = vsyncadd [#allocation5], %s55
      %s57 = sshll.u32 [#allocation4], 4
      %s58 = int_to_ptr.vmem [resolvable:$true] %s57
      %63 = dma.hbm_to_vmem [thread:$0]  %s4, 1792, %s58, [#allocation5], 256, 256, 16
    $region21: #{tpu_custom_call.1} parent=1 // pred_fallthru
      _
    // Predicated region
    $region22: #{tpu_custom_call.1} parent=1 // pred_check
      _
    $region23: #{tpu_custom_call.1} parent=1 // pred_check_branch
      %65 = sbr.rel (0) target = $region25
    $region24: #{tpu_custom_call.1} parent=1 // pred_region
      %s67 = ssub.s32 32, 32
      %68 = vsyncadd [#allocation5], %s67
      %s70 = sshll.u32 [#allocation6], 4
      %s71 = int_to_ptr.vmem [resolvable:$true] %s70
      %73 = dma.hbm_to_vmem [thread:$0]  %s5, 32, %s71, [#allocation5]
    $region25: #{tpu_custom_call.1} parent=1 // pred_fallthru
      _
    // Predicated region
    $region26: #{tpu_custom_call.1} parent=1 // pred_check
      _
    $region27: #{tpu_custom_call.1} parent=1 // pred_check_branch
      %75 = sbr.rel (0) target = $region29
    $region28: #{tpu_custom_call.1} parent=1 // pred_region
      _
    $region29: #{tpu_custom_call.1} parent=1 // pred_fallthru
      _
    // Predicated region
    $region30: #{tpu_custom_call.1} parent=1 // pred_check
      _
    $region31: #{tpu_custom_call.1} parent=1 // pred_check_branch
      %77 = sbr.rel (0) target = $region33
    $region32: #{tpu_custom_call.1} parent=1 // pred_region
      %s79 = ssub.s32 64, 64
      %80 = vsyncadd [#allocation8], %s79
      %s82 = sshll.u32 [#allocation7], 4
      %s83 = int_to_ptr.vmem [resolvable:$true] %s82
      %85 = dma.hbm_to_vmem [thread:$0]  %s7, 64, %s83, [#allocation8]
    $region33: #{tpu_custom_call.1} parent=1 // pred_fallthru
      _
    // Predicated region
    $region34: #{tpu_custom_call.1} parent=1 // pred_check
      _
    $region35: #{tpu_custom_call.1} parent=1 // pred_check_branch
      %87 = sbr.rel (0) target = $region37
    $region36: #{tpu_custom_call.1} parent=1 // pred_region
      %s89 = ssub.s32 1792, 1792
      %90 = vsyncadd [#allocation8], %s89
      %s91 = sshll.u32 [#allocation9], 4
      %s92 = int_to_ptr.vmem [resolvable:$true] %s91
      %97 = dma.hbm_to_vmem [thread:$0]  %s8, 1792, %s92, [#allocation8], 256, 256, 16
    $region37: #{tpu_custom_call.1} parent=1 // pred_fallthru
      _
    // Predicated region
    $region38: #{tpu_custom_call.1} parent=1 // pred_check
      _
    $region39: #{tpu_custom_call.1} parent=1 // pred_check_branch
      %99 = sbr.rel (0) target = $region41
    $region40: #{tpu_custom_call.1} parent=1 // pred_region
      %s101 = ssub.s32 32, 32
      %102 = vsyncadd [#allocation11], %s101
      %s104 = sshll.u32 [#allocation10], 4
      %s105 = int_to_ptr.vmem [resolvable:$true] %s104
      %107 = dma.hbm_to_vmem [thread:$0]  %s9, 32, %s105, [#allocation11]
    $region41: #{tpu_custom_call.1} parent=1 // pred_fallthru
      _
    // Predicated region
    $region42: #{tpu_custom_call.1} parent=1 // pred_check
      _
    $region43: #{tpu_custom_call.1} parent=1 // pred_check_branch
      %109 = sbr.rel (0) target = $region45
    $region44: #{tpu_custom_call.1} parent=1 // pred_region
      %s111 = ssub.s32 896, 896
      %112 = vsyncadd [#allocation11], %s111
      %s113 = sshll.u32 [#allocation12], 4
      %s114 = int_to_ptr.vmem [resolvable:$true] %s113
      %119 = dma.hbm_to_vmem [thread:$0]  %s10, 896, %s114, [#allocation11], 128, 128, 8
    $region45: #{tpu_custom_call.1} parent=1 // pred_fallthru
      _
    // Predicated region
    $region46: #{tpu_custom_call.1} parent=1 // pred_check
      _
    $region47: #{tpu_custom_call.1} parent=1 // pred_check_branch
      %121 = sbr.rel (0) target = $region49
    $region48: #{tpu_custom_call.1} parent=1 // pred_region
      _
    $region49: #{tpu_custom_call.1} parent=1 // pred_fallthru
      _
    // Predicated region
    $region50: #{tpu_custom_call.1} parent=1 // pred_check
      _
    $region51: #{tpu_custom_call.1} parent=1 // pred_check_branch
      %123 = sbr.rel (0) target = $region53
    $region52: #{tpu_custom_call.1} parent=1 // pred_region
      %s125 = ssub.s32 1792, 1792
      %126 = vsyncadd [#allocation14], %s125
      %s127 = sshll.u32 [#allocation13], 4
      %s128 = int_to_ptr.vmem [resolvable:$true] %s127
      %133 = dma.hbm_to_vmem [thread:$0]  %s12, 1792, %s128, [#allocation14], 256, 256, 16
    $region53: #{tpu_custom_call.1} parent=1 // pred_fallthru
      _
    // Predicated region
    $region54: #{tpu_custom_call.1} parent=1 // pred_check
      _
    $region55: #{tpu_custom_call.1} parent=1 // pred_check_branch
      %135 = sbr.rel (0) target = $region57
    $region56: #{tpu_custom_call.1} parent=1 // pred_region
      %s137 = ssub.s32 32, 32
      %138 = vsyncadd [#allocation14], %s137
      %s140 = sshll.u32 [#allocation15], 4
      %s141 = int_to_ptr.vmem [resolvable:$true] %s140
      %143 = dma.hbm_to_vmem [thread:$0]  %s13, 32, %s141, [#allocation14]
    $region57: #{tpu_custom_call.1} parent=1 // pred_fallthru
      _
    // Predicated region
    $region58: #{tpu_custom_call.1} parent=1 // pred_check
      _
    $region59: #{tpu_custom_call.1} parent=1 // pred_check_branch
      %145 = sbr.rel (0) target = $region61
    $region60: #{tpu_custom_call.1} parent=1 // pred_region
      %s147 = ssub.s32 896, 896
      %148 = vsyncadd [#allocation17], %s147
      %s149 = sshll.u32 [#allocation16], 4
      %s150 = int_to_ptr.vmem [resolvable:$true] %s149
      %155 = dma.hbm_to_vmem [thread:$0]  %s14, 896, %s150, [#allocation17], 128, 128, 8
    $region61: #{tpu_custom_call.1} parent=1 // pred_fallthru
      _
    // Predicated region
    $region62: #{tpu_custom_call.1} parent=1 // pred_check
      _
    $region63: #{tpu_custom_call.1} parent=1 // pred_check_branch
      %157 = sbr.rel (0) target = $region65
    $region64: #{tpu_custom_call.1} parent=1 // pred_region
      _
    $region65: #{tpu_custom_call.1} parent=1 // pred_fallthru
      _
    // Predicated region
    $region66: #{tpu_custom_call.1} parent=1 // pred_check
      _
    $region67: #{tpu_custom_call.1} parent=1 // pred_check_branch
      %159 = sbr.rel (0) target = $region69
    $region68: #{tpu_custom_call.1} parent=1 // pred_region
      %s161 = ssub.s32 1792, 1792
      %162 = vsyncadd [#allocation17], %s161
      %s163 = sshll.u32 [#allocation18], 4
      %s164 = int_to_ptr.vmem [resolvable:$true] %s163
      %169 = dma.hbm_to_vmem [thread:$0]  %s16, 1792, %s164, [#allocation17], 256, 256, 16
    $region69: #{tpu_custom_call.1} parent=1 // pred_fallthru
      _
    // Predicated region
    $region70: #{tpu_custom_call.1} parent=1 // pred_check
      _
    $region71: #{tpu_custom_call.1} parent=1 // pred_check_branch
      %171 = sbr.rel (0) target = $region73
    $region72: #{tpu_custom_call.1} parent=1 // pred_region
      _
    $region73: #{tpu_custom_call.1} parent=1 // pred_fallthru
      _
    // Predicated region
    $region74: #{tpu_custom_call.1} parent=1 // pred_check
      _
    $region75: #{tpu_custom_call.1} parent=1 // pred_check_branch
      %173 = sbr.rel (0) target = $region77
    $region76: #{tpu_custom_call.1} parent=1 // pred_region
      %s175 = ssub.s32 896, 896
      %176 = vsyncadd [#allocation20], %s175
      %s177 = sshll.u32 [#allocation19], 4
      %s178 = int_to_ptr.vmem [resolvable:$true] %s177
      %183 = dma.hbm_to_vmem [thread:$0]  %s18, 896, %s178, [#allocation20], 128, 128, 8
    $region77: #{tpu_custom_call.1} parent=1 // pred_fallthru
      _
    // Predicated region
    $region78: #{tpu_custom_call.1} parent=1 // pred_check
      _
    $region79: #{tpu_custom_call.1} parent=1 // pred_check_branch
      %185 = sbr.rel (0) target = $region81
    $region80: #{tpu_custom_call.1} parent=1 // pred_region
      _
    $region81: #{tpu_custom_call.1} parent=1 // pred_fallthru
      _
    // Predicated region
    $region82: #{tpu_custom_call.1} parent=1 // pred_check
      _
    $region83: #{tpu_custom_call.1} parent=1 // pred_check_branch
      %187 = sbr.rel (0) target = $region85
    $region84: #{tpu_custom_call.1} parent=1 // pred_region
      %s189 = ssub.s32 896, 896
      %190 = vsyncadd [#allocation20], %s189
      %s191 = sshll.u32 [#allocation21], 4
      %s192 = int_to_ptr.vmem [resolvable:$true] %s191
      %197 = dma.hbm_to_vmem [thread:$0]  %s20, 896, %s192, [#allocation20], 128, 128, 8
    $region85: #{tpu_custom_call.1} parent=1 // pred_fallthru
      _
    // Predicated region
    $region86: #{tpu_custom_call.1} parent=1 // pred_check
      _
    $region87: #{tpu_custom_call.1} parent=1 // pred_check_branch
      %199 = sbr.rel (0) target = $region89
    $region88: #{tpu_custom_call.1} parent=1 // pred_region
      _
    $region89: #{tpu_custom_call.1} parent=1 // pred_fallthru
      _
    // Predicated region
    $region90: #{tpu_custom_call.1} parent=1 // pred_check
      _
    $region91: #{tpu_custom_call.1} parent=1 // pred_check_branch
      %201 = sbr.rel (0) target = $region93
    $region92: #{tpu_custom_call.1} parent=1 // pred_region
      _
    $region93: #{tpu_custom_call.1} parent=1 // pred_fallthru
      _
    // Predicated region
    $region94: #{tpu_custom_call.1} parent=1 // pred_check
      _
    $region95: #{tpu_custom_call.1} parent=1 // pred_check_branch
      %203 = sbr.rel (0) target = $region97
    $region96: #{tpu_custom_call.1} parent=1 // pred_region
      _
    $region97: #{tpu_custom_call.1} parent=1 // pred_fallthru
      _
    // Predicated region
    $region98: #{tpu_custom_call.1} parent=1 // pred_check
      _
    $region99: #{tpu_custom_call.1} parent=1 // pred_check_branch
      %205 = sbr.rel (0) target = $region101
    $region100: #{tpu_custom_call.1} parent=1 // pred_region
      %206 = dma.done [#allocation3], 16
    $region101: #{tpu_custom_call.1} parent=1 // pred_fallthru
      _
    // Predicated region
    $region102: #{tpu_custom_call.1} parent=1 // pred_check
      _
    $region103: #{tpu_custom_call.1} parent=1 // pred_check_branch
      %208 = sbr.rel (0) target = $region105
    $region104: #{tpu_custom_call.1} parent=1 // pred_region
      %209 = dma.done [#allocation5], 1792
    $region105: #{tpu_custom_call.1} parent=1 // pred_fallthru
      _
    // Predicated region
    $region106: #{tpu_custom_call.1} parent=1 // pred_check
      _
    $region107: #{tpu_custom_call.1} parent=1 // pred_check_branch
      %211 = sbr.rel (0) target = $region109
    $region108: #{tpu_custom_call.1} parent=1 // pred_region
      %212 = dma.done [#allocation5], 32
    $region109: #{tpu_custom_call.1} parent=1 // pred_fallthru
      _
    // Predicated region
    $region110: #{tpu_custom_call.1} parent=1 // pred_check
      _
    $region111: #{tpu_custom_call.1} parent=1 // pred_check_branch
      %214 = sbr.rel (0) target = $region113
    $region112: #{tpu_custom_call.1} parent=1 // pred_region
      %215 = dma.done [#allocation8], 64
    $region113: #{tpu_custom_call.1} parent=1 // pred_fallthru
      _
    // Predicated region
    $region114: #{tpu_custom_call.1} parent=1 // pred_check
      _
    $region115: #{tpu_custom_call.1} parent=1 // pred_check_branch
      %217 = sbr.rel (0) target = $region117
    $region116: #{tpu_custom_call.1} parent=1 // pred_region
      %218 = dma.done [#allocation8], 1792
    $region117: #{tpu_custom_call.1} parent=1 // pred_fallthru
      _
    // Predicated region
    $region118: #{tpu_custom_call.1} parent=1 // pred_check
      _
    $region119: #{tpu_custom_call.1} parent=1 // pred_check_branch
      %220 = sbr.rel (0) target = $region121
    $region120: #{tpu_custom_call.1} parent=1 // pred_region
      %221 = dma.done [#allocation11], 32
    $region121: #{tpu_custom_call.1} parent=1 // pred_fallthru
      _
    // Predicated region
    $region122: #{tpu_custom_call.1} parent=1 // pred_check
      _
    $region123: #{tpu_custom_call.1} parent=1 // pred_check_branch
      %223 = sbr.rel (0) target = $region125
    $region124: #{tpu_custom_call.1} parent=1 // pred_region
      %224 = dma.done [#allocation11], 896
    $region125: #{tpu_custom_call.1} parent=1 // pred_fallthru
      _
    // Predicated region
    $region126: #{tpu_custom_call.1} parent=1 // pred_check
      _
    $region127: #{tpu_custom_call.1} parent=1 // pred_check_branch
      %226 = sbr.rel (0) target = $region129
    $region128: #{tpu_custom_call.1} parent=1 // pred_region
      %227 = dma.done [#allocation14], 1792
    $region129: #{tpu_custom_call.1} parent=1 // pred_fallthru
      _
    // Predicated region
    $region130: #{tpu_custom_call.1} parent=1 // pred_check
      _
    $region131: #{tpu_custom_call.1} parent=1 // pred_check_branch
      %229 = sbr.rel (0) target = $region133
    $region132: #{tpu_custom_call.1} parent=1 // pred_region
      %230 = dma.done [#allocation14], 32
    $region133: #{tpu_custom_call.1} parent=1 // pred_fallthru
      _
    // Predicated region
    $region134: #{tpu_custom_call.1} parent=1 // pred_check
      _
    $region135: #{tpu_custom_call.1} parent=1 // pred_check_branch
      %232 = sbr.rel (0) target = $region137
    $region136: #{tpu_custom_call.1} parent=1 // pred_region
      %233 = dma.done [#allocation17], 896
    $region137: #{tpu_custom_call.1} parent=1 // pred_fallthru
      _
    // Predicated region
    $region138: #{tpu_custom_call.1} parent=1 // pred_check
      _
    $region139: #{tpu_custom_call.1} parent=1 // pred_check_branch
      %235 = sbr.rel (0) target = $region141
    $region140: #{tpu_custom_call.1} parent=1 // pred_region
      %236 = dma.done [#allocation17], 1792
    $region141: #{tpu_custom_call.1} parent=1 // pred_fallthru
      _
    // Predicated region
    $region142: #{tpu_custom_call.1} parent=1 // pred_check
      _
    $region143: #{tpu_custom_call.1} parent=1 // pred_check_branch
      %238 = sbr.rel (0) target = $region145
    $region144: #{tpu_custom_call.1} parent=1 // pred_region
      %239 = dma.done [#allocation20], 896
    $region145: #{tpu_custom_call.1} parent=1 // pred_fallthru
      _
    // Predicated region
    $region146: #{tpu_custom_call.1} parent=1 // pred_check
      _
    $region147: #{tpu_custom_call.1} parent=1 // pred_check_branch
      %241 = sbr.rel (0) target = $region149
    $region148: #{tpu_custom_call.1} parent=1 // pred_region
      %242 = dma.done [#allocation20], 896
    $region149: #{tpu_custom_call.1} parent=1 // pred_fallthru
      _
    %v243 = vld [vmem:[%s0] sm:$0xff]
    %v244 = vld [vmem:[%s1] sm:$0xf]
    %v245 = vld [vmem:[#allocation2] sm:$0x1]
    %v247 = vlaneseq
    %v248 = vshrl.u32 %v247, 7
    %v249 = vsub.s32 0, %v248
    %v250 = vrot.slane %v245, %v249
    %vm252 = vcmask 31744
    %v254 = vsel %vm252, %v243, 0
    %vm256 = vcmask 1043456
    %v258 = vsel %vm256, %v244, 0
    %260 = vmatprep.subr.mxu0 0.0
    %261 = vmatpush1.msra.mxu0 0.0
    %262 = vmatprep.subr.mxu0 0.0
    %263 = vmatpush1.msra.mxu0 0.0
    %264 = vmatprep.subr.mxu0 0.0
    %265 = vmatpush1.msra.mxu0 0.0
    %266 = vmatprep.subr.mxu0 0.0
    %267 = vmatpush1.msra.mxu0 0.0
    %268 = vmatprep.subr.mxu0 0.0
    %269 = vmatpush1.msra.mxu0 0.0
    %270 = vmatprep.subr.mxu0 0.0
    %271 = vmatpush1.msra.mxu0 0.0
    %272 = vmatprep.subr.mxu0 0.0
    %273 = vmatpush1.msra.mxu0 0.0
    %274 = vmatprep.subr.mxu0 0.0
    %275 = vmatpush1.msra.mxu0 0.0
    %276 = vmatprep.subr.mxu0 0.0
    %277 = vmatpush1.msra.mxu0 0.0
    %278 = vmatprep.subr.mxu0 0.0
    %279 = vmatpush1.msra.mxu0 0.0
    %280 = vmatprep.subr.mxu0 0.0
    %281 = vmatpush1.msra.mxu0 0.0
    %282 = vmatprep.subr.mxu0 0.0
    %283 = vmatpush1.msra.mxu0 0.0
    %284 = vmatprep.subr.mxu0 0.0
    %285 = vmatpush1.msra.mxu0 0.0
    %286 = vmatprep.subr.mxu0 0.0
    %287 = vmatpush1.msra.mxu0 0.0
    %288 = vmatprep.subr.mxu0 0.0
    %289 = vmatpush1.msra.mxu0 0.0
    %290 = vmatprep.subr.mxu0 0.0
    %291 = vmatpush1.msra.mxu0 %v258
    %292 = vmatprep.subr.mxu0 0.0
    %293 = vmatpush2.msra.mxu0 0.0
    %294 = vmatprep.subr.mxu0 0.0
    %295 = vmatpush2.msra.mxu0 0.0
    %296 = vmatprep.subr.mxu0 0.0
    %297 = vmatpush2.msra.mxu0 0.0
    %298 = vmatprep.subr.mxu0 0.0
    %299 = vmatpush2.msra.mxu0 0.0
    %300 = vmatprep.subr.mxu0 0.0
    %301 = vmatpush2.msra.mxu0 0.0
    %302 = vmatprep.subr.mxu0 0.0
    %303 = vmatpush2.msra.mxu0 0.0
    %304 = vmatprep.subr.mxu0 0.0
    %305 = vmatpush2.msra.mxu0 0.0
    %306 = vmatprep.subr.mxu0 0.0
    %307 = vmatpush2.msra.mxu0 0.0
    %308 = vmatprep.subr.mxu0 0.0
    %309 = vmatpush2.msra.mxu0 0.0
    %310 = vmatprep.subr.mxu0 0.0
    %311 = vmatpush2.msra.mxu0 0.0
    %312 = vmatprep.subr.mxu0 0.0
    %313 = vmatpush2.msra.mxu0 0.0
    %314 = vmatprep.subr.mxu0 0.0
    %315 = vmatpush2.msra.mxu0 0.0
    %316 = vmatprep.subr.mxu0 0.0
    %317 = vmatpush2.msra.mxu0 0.0
    %318 = vmatprep.subr.mxu0 0.0
    %319 = vmatpush2.msra.mxu0 0.0
    %320 = vmatprep.subr.mxu0 0.0
    %321 = vmatpush2.msra.mxu0 0.0
    %322 = vmatprep.subr.mxu0 0.0
    %323 = vmatpush2.msra.mxu0 0.0
    %324 = vmatprep.mubr.f32.mxu0 0.0
    %325 = vmatmul.mubr.f32.gmra.mxu0 %v254
    %v326 = vpop.f32.mrf.mxu0
    %v327 = vadd.f32 %v250, %v326
    %v328 = vpop.f32.mrf.mxu0
    %329 = vdwg.mxu0
    %331 = vrot.lane.b32.xlu0 %v327, 4
    %v332 = vpop.permute.xlu0 %331
    %v334 = vmul.f32 %v243, %v332
    %v335 = vld [vmem:[%s3] sm:$0xf]
    %337 = vrot.lane.b32.xlu0 %v334, 124
    %v338 = vpop.permute.xlu0 %337
    %v339 = vsel %vm252, %v338, 0
    %v342 = vsel %vm256, %v335, 0
    %344 = vmatprep.subr.mxu0 0.0
    %345 = vmatpush1.msra.mxu0 0.0
    %346 = vmatprep.subr.mxu0 0.0
    %347 = vmatpush1.msra.mxu0 0.0
    %348 = vmatprep.subr.mxu0 0.0
    %349 = vmatpush1.msra.mxu0 0.0
    %350 = vmatprep.subr.mxu0 0.0
    %351 = vmatpush1.msra.mxu0 0.0
    %352 = vmatprep.subr.mxu0 0.0
    %353 = vmatpush1.msra.mxu0 0.0
    %354 = vmatprep.subr.mxu0 0.0
    %355 = vmatpush1.msra.mxu0 0.0
    %356 = vmatprep.subr.mxu0 0.0
    %357 = vmatpush1.msra.mxu0 0.0
    %358 = vmatprep.subr.mxu0 0.0
    %359 = vmatpush1.msra.mxu0 0.0
    %360 = vmatprep.subr.mxu0 0.0
    %361 = vmatpush1.msra.mxu0 0.0
    %362 = vmatprep.subr.mxu0 0.0
    %363 = vmatpush1.msra.mxu0 0.0
    %364 = vmatprep.subr.mxu0 0.0
    %365 = vmatpush1.msra.mxu0 0.0
    %366 = vmatprep.subr.mxu0 0.0
    %367 = vmatpush1.msra.mxu0 0.0
    %368 = vmatprep.subr.mxu0 0.0
    %369 = vmatpush1.msra.mxu0 0.0
    %370 = vmatprep.subr.mxu0 0.0
    %371 = vmatpush1.msra.mxu0 0.0
    %372 = vmatprep.subr.mxu0 0.0
    %373 = vmatpush1.msra.mxu0 0.0
    %374 = vmatprep.subr.mxu0 0.0
    %375 = vmatpush1.msra.mxu0 %v342
    %376 = vmatprep.subr.mxu0 0.0
    %377 = vmatpush2.msra.mxu0 0.0
    %378 = vmatprep.subr.mxu0 0.0
    %379 = vmatpush2.msra.mxu0 0.0
    %380 = vmatprep.subr.mxu0 0.0
    %381 = vmatpush2.msra.mxu0 0.0
    %382 = vmatprep.subr.mxu0 0.0
    %383 = vmatpush2.msra.mxu0 0.0
    %384 = vmatprep.subr.mxu0 0.0
    %385 = vmatpush2.msra.mxu0 0.0
    %386 = vmatprep.subr.mxu0 0.0
    %387 = vmatpush2.msra.mxu0 0.0
    %388 = vmatprep.subr.mxu0 0.0
    %389 = vmatpush2.msra.mxu0 0.0
    %390 = vmatprep.subr.mxu0 0.0
    %391 = vmatpush2.msra.mxu0 0.0
    %392 = vmatprep.subr.mxu0 0.0
    %393 = vmatpush2.msra.mxu0 0.0
    %394 = vmatprep.subr.mxu0 0.0
    %395 = vmatpush2.msra.mxu0 0.0
    %396 = vmatprep.subr.mxu0 0.0
    %397 = vmatpush2.msra.mxu0 0.0
    %398 = vmatprep.subr.mxu0 0.0
    %399 = vmatpush2.msra.mxu0 0.0
    %400 = vmatprep.subr.mxu0 0.0
    %401 = vmatpush2.msra.mxu0 0.0
    %402 = vmatprep.subr.mxu0 0.0
    %403 = vmatpush2.msra.mxu0 0.0
    %404 = vmatprep.subr.mxu0 0.0
    %405 = vmatpush2.msra.mxu0 0.0
    %406 = vmatprep.subr.mxu0 0.0
    %407 = vmatpush2.msra.mxu0 0.0
    %408 = vmatprep.mubr.f32.mxu0 0.0
    %409 = vmatmul.mubr.f32.gmra.mxu0 %v339
    %v410 = vpop.f32.mrf.mxu0
    %v411 = vadd.f32 0.0, %v410
    %v412 = vpop.f32.mrf.mxu0
    %413 = vdwg.mxu0
    %415 = vrot.lane.b32.xlu0 %v411, 4
    %v416 = vpop.permute.xlu0 %415
    %v418 = vadd.f32 %v327, %v416
    %vm419 = vcmp.gt.f32.partialorder %v418, 20.0
    %v420 = vmin.f32 %v418, 20.0
    %v421 = vmul.f32 %v420, 1.442695
    %v422 = vpow.pop %v421
    %v423 = vadd.f32 %v422, 1.0
    %v424 = vlog2.pop %v423
    %v425 = vmul.f32 %v424, 0.6931472
    %v426 = vmul.f32 -0.5, %v422
    %v427 = vadd.f32 %v426, 1.0
    %v428 = vmul.f32 %v427, %v422
    %v429 = vand.u32 2147483647, %v422
    %vm430 = vcmp.lt.f32.partialorder %v429, 0.0004427343
    %v431 = vsel %vm430, %v428, %v425
    %v432 = vsel %vm419, %v418, %v431
    %vm433 = vcmp.gt.f32.partialorder %v327, 20.0
    %v434 = vmin.f32 %v327, 20.0
    %v435 = vmul.f32 %v434, 1.442695
    %v436 = vpow.pop %v435
    %v437 = vadd.f32 %v436, 1.0
    %v438 = vlog2.pop %v437
    %v439 = vmul.f32 %v438, 0.6931472
    %v440 = vmul.f32 -0.5, %v436
    %v441 = vadd.f32 %v440, 1.0
    %v442 = vmul.f32 %v441, %v436
    %v443 = vand.u32 2147483647, %v436
    %vm444 = vcmp.lt.f32.partialorder %v443, 0.0004427343
    %v445 = vsel %vm444, %v442, %v439
    %v446 = vsel %vm433, %v327, %v445
    %v447 = vld [vmem:[#allocation4] sm:$0xff]
    %v448 = vld [vmem:[#allocation4 + $0x8] sm:$0xff]
    %v449 = vld [vmem:[#allocation4 + $0x10] sm:$0xff]
    %v450 = vld [vmem:[#allocation4 + $0x18] sm:$0xff]
    %v451 = vld [vmem:[#allocation4 + $0x20] sm:$0xff]
    %v452 = vld [vmem:[#allocation4 + $0x28] sm:$0xff]
    %v453 = vld [vmem:[#allocation4 + $0x30] sm:$0xff]
    %v454 = vld [vmem:[#allocation4 + $0x38] sm:$0xff]
    %v455 = vld [vmem:[#allocation4 + $0x40] sm:$0xff]
    %v456 = vld [vmem:[#allocation4 + $0x48] sm:$0xff]
    %v457 = vld [vmem:[#allocation4 + $0x50] sm:$0xff]
    %v458 = vld [vmem:[#allocation4 + $0x58] sm:$0xff]
    %v459 = vld [vmem:[#allocation4 + $0x60] sm:$0x3]
    %v460 = vld [vmem:[#allocation4 + $0x68] sm:$0x3]
    %v461 = vld [vmem:[#allocation6] sm:$0x3]
    %v463 = vlaneseq
    %v464 = vshrl.u32 %v463, 7
    %v465 = vsub.s32 0, %v464
    %v466 = vrot.slane %v461, %v465
    %v467 = vlaneseq
    %v468 = vshrl.u32 %v467, 7
    %v469 = vsub.s32 1, %v468
    %v470 = vrot.slane %v461, %v469
    %474 = vrot.lane.b32.xlu0 %v446, 74
    %v475 = vpop.permute.xlu0 %474
    %vm476 = vcmask 408576
    %v477 = vsel %vm476, %v475, 0
    %vm479 = vcmask 1041408
    %v481 = vsel %vm479, %v459, 0
    %v484 = vsel %vm479, %v460, 0
    %486 = vmatprep.subr.mxu0 0.0
    %487 = vmatpush1.msra.mxu0 0.0
    %488 = vmatprep.subr.mxu0 0.0
    %489 = vmatpush1.msra.mxu0 0.0
    %490 = vmatprep.subr.mxu0 0.0
    %491 = vmatpush1.msra.mxu0 0.0
    %492 = vmatprep.subr.mxu0 0.0
    %493 = vmatpush1.msra.mxu0 0.0
    %494 = vmatprep.subr.mxu0 0.0
    %495 = vmatpush1.msra.mxu0 0.0
    %496 = vmatprep.subr.mxu0 0.0
    %497 = vmatpush1.msra.mxu0 0.0
    %498 = vmatprep.subr.mxu0 0.0
    %499 = vmatpush1.msra.mxu0 0.0
    %500 = vmatprep.subr.mxu0 0.0
    %501 = vmatpush1.msra.mxu0 0.0
    %502 = vmatprep.subr.mxu0 0.0
    %503 = vmatpush1.msra.mxu0 0.0
    %504 = vmatprep.subr.mxu0 %v484
    %505 = vmatpush1.msra.mxu0 %v481
    %506 = vmatprep.subr.mxu0 %v458
    %507 = vmatpush1.msra.mxu0 %v457
    %508 = vmatprep.subr.mxu0 %v456
    %509 = vmatpush1.msra.mxu0 %v455
    %510 = vmatprep.subr.mxu0 %v454
    %511 = vmatpush1.msra.mxu0 %v453
    %512 = vmatprep.subr.mxu0 %v452
    %513 = vmatpush1.msra.mxu0 %v451
    %514 = vmatprep.subr.mxu0 %v450
    %515 = vmatpush1.msra.mxu0 %v449
    %516 = vmatprep.subr.mxu0 %v448
    %517 = vmatpush1.msra.mxu0 %v447
    %518 = vmatprep.subr.mxu0 0.0
    %519 = vmatpush2.msra.mxu0 0.0
    %520 = vmatprep.subr.mxu0 0.0
    %521 = vmatpush2.msra.mxu0 0.0
    %522 = vmatprep.subr.mxu0 0.0
    %523 = vmatpush2.msra.mxu0 0.0
    %524 = vmatprep.subr.mxu0 0.0
    %525 = vmatpush2.msra.mxu0 0.0
    %526 = vmatprep.subr.mxu0 0.0
    %527 = vmatpush2.msra.mxu0 0.0
    %528 = vmatprep.subr.mxu0 0.0
    %529 = vmatpush2.msra.mxu0 0.0
    %530 = vmatprep.subr.mxu0 0.0
    %531 = vmatpush2.msra.mxu0 0.0
    %532 = vmatprep.subr.mxu0 0.0
    %533 = vmatpush2.msra.mxu0 0.0
    %534 = vmatprep.subr.mxu0 0.0
    %535 = vmatpush2.msra.mxu0 0.0
    %536 = vmatprep.subr.mxu0 0.0
    %537 = vmatpush2.msra.mxu0 0.0
    %538 = vmatprep.subr.mxu0 0.0
    %539 = vmatpush2.msra.mxu0 0.0
    %540 = vmatprep.subr.mxu0 0.0
    %541 = vmatpush2.msra.mxu0 0.0
    %542 = vmatprep.subr.mxu0 0.0
    %543 = vmatpush2.msra.mxu0 0.0
    %544 = vmatprep.subr.mxu0 0.0
    %545 = vmatpush2.msra.mxu0 0.0
    %546 = vmatprep.subr.mxu0 0.0
    %547 = vmatpush2.msra.mxu0 0.0
    %548 = vmatprep.subr.mxu0 0.0
    %549 = vmatpush2.msra.mxu0 0.0
    %550 = vmatprep.mubr.f32.mxu0 0.0
    %551 = vmatmul.mubr.f32.gmra.mxu0 %v477
    %v552 = vpop.f32.mrf.mxu0
    %v553 = vadd.f32 %v466, %v552
    %v554 = vpop.f32.mrf.mxu0
    %v555 = vadd.f32 %v470, %v554
    %556 = vdwg.mxu0
    %vm557 = vcmp.gt.f32.partialorder %v553, 20.0
    %v558 = vmin.f32 %v553, 20.0
    %v559 = vmul.f32 %v558, 1.442695
    %v560 = vpow.pop %v559
    %v561 = vadd.f32 %v560, 1.0
    %v562 = vlog2.pop %v561
    %v563 = vmul.f32 %v562, 0.6931472
    %v564 = vmul.f32 -0.5, %v560
    %v565 = vadd.f32 %v564, 1.0
    %v566 = vmul.f32 %v565, %v560
    %v567 = vand.u32 2147483647, %v560
    %vm568 = vcmp.lt.f32.partialorder %v567, 0.0004427343
    %v569 = vsel %vm568, %v566, %v563
    %v570 = vsel %vm557, %v553, %v569
    %572 = vrot.lane.b32.xlu0 %v570, 82
    %v573 = vpop.permute.xlu0 %572
    %v575 = vmul.f32 %v432, %v573
    %v576 = vld [vmem:[%s6] sm:$0xff]
    %v577 = vld [vmem:[%s6 + $0x8] sm:$0xff]
    %v578 = vld [vmem:[%s6 + $0x10] sm:$0xff]
    %v579 = vld [vmem:[%s6 + $0x18] sm:$0xff]
    %v580 = vld [vmem:[%s6 + $0x20] sm:$0xff]
    %v581 = vld [vmem:[%s6 + $0x28] sm:$0xff]
    %v582 = vld [vmem:[%s6 + $0x30] sm:$0x3]
    %584 = vrot.lane.b32.xlu0 %v575, 124
    %v585 = vpop.permute.xlu0 %584
    %v586 = vsel %vm476, %v585, 0
    %v589 = vsel %vm479, %v582, 0
    %591 = vmatprep.subr.mxu0 0.0
    %592 = vmatpush1.msra.mxu0 0.0
    %593 = vmatprep.subr.mxu0 0.0
    %594 = vmatpush1.msra.mxu0 0.0
    %595 = vmatprep.subr.mxu0 0.0
    %596 = vmatpush1.msra.mxu0 0.0
    %597 = vmatprep.subr.mxu0 0.0
    %598 = vmatpush1.msra.mxu0 0.0
    %599 = vmatprep.subr.mxu0 0.0
    %600 = vmatpush1.msra.mxu0 0.0
    %601 = vmatprep.subr.mxu0 0.0
    %602 = vmatpush1.msra.mxu0 0.0
    %603 = vmatprep.subr.mxu0 0.0
    %604 = vmatpush1.msra.mxu0 0.0
    %605 = vmatprep.subr.mxu0 0.0
    %606 = vmatpush1.msra.mxu0 0.0
    %607 = vmatprep.subr.mxu0 0.0
    %608 = vmatpush1.msra.mxu0 0.0
    %609 = vmatprep.subr.mxu0 0.0
    %610 = vmatpush1.msra.mxu0 %v589
    %611 = vmatprep.subr.mxu0 0.0
    %612 = vmatpush1.msra.mxu0 %v581
    %613 = vmatprep.subr.mxu0 0.0
    %614 = vmatpush1.msra.mxu0 %v580
    %615 = vmatprep.subr.mxu0 0.0
    %616 = vmatpush1.msra.mxu0 %v579
    %617 = vmatprep.subr.mxu0 0.0
    %618 = vmatpush1.msra.mxu0 %v578
    %619 = vmatprep.subr.mxu0 0.0
    %620 = vmatpush1.msra.mxu0 %v577
    %621 = vmatprep.subr.mxu0 0.0
    %622 = vmatpush1.msra.mxu0 %v576
    %623 = vmatprep.subr.mxu0 0.0
    %624 = vmatpush2.msra.mxu0 0.0
    %625 = vmatprep.subr.mxu0 0.0
    %626 = vmatpush2.msra.mxu0 0.0
    %627 = vmatprep.subr.mxu0 0.0
    %628 = vmatpush2.msra.mxu0 0.0
    %629 = vmatprep.subr.mxu0 0.0
    %630 = vmatpush2.msra.mxu0 0.0
    %631 = vmatprep.subr.mxu0 0.0
    %632 = vmatpush2.msra.mxu0 0.0
    %633 = vmatprep.subr.mxu0 0.0
    %634 = vmatpush2.msra.mxu0 0.0
    %635 = vmatprep.subr.mxu0 0.0
    %636 = vmatpush2.msra.mxu0 0.0
    %637 = vmatprep.subr.mxu0 0.0
    %638 = vmatpush2.msra.mxu0 0.0
    %639 = vmatprep.subr.mxu0 0.0
    %640 = vmatpush2.msra.mxu0 0.0
    %641 = vmatprep.subr.mxu0 0.0
    %642 = vmatpush2.msra.mxu0 0.0
    %643 = vmatprep.subr.mxu0 0.0
    %644 = vmatpush2.msra.mxu0 0.0
    %645 = vmatprep.subr.mxu0 0.0
    %646 = vmatpush2.msra.mxu0 0.0
    %647 = vmatprep.subr.mxu0 0.0
    %648 = vmatpush2.msra.mxu0 0.0
    %649 = vmatprep.subr.mxu0 0.0
    %650 = vmatpush2.msra.mxu0 0.0
    %651 = vmatprep.subr.mxu0 0.0
    %652 = vmatpush2.msra.mxu0 0.0
    %653 = vmatprep.subr.mxu0 0.0
    %654 = vmatpush2.msra.mxu0 0.0
    %655 = vmatprep.mubr.f32.mxu0 0.0
    %656 = vmatmul.mubr.f32.gmra.mxu0 %v586
    %v657 = vpop.f32.mrf.mxu0
    %v658 = vadd.f32 0.0, %v657
    %v659 = vpop.f32.mrf.mxu0
    %660 = vdwg.mxu0
    %v661 = vadd.f32 %v553, %v658
    %663 = vrot.lane.b32.xlu0 %v553, 32
    %v664 = vpop.permute.xlu0 %663
    %v666 = vmul.f32 %v243, %v664
    %v667 = vld [vmem:[#allocation7] sm:$0xf]
    %669 = vrot.lane.b32.xlu0 %v666, 124
    %v670 = vpop.permute.xlu0 %669
    %v671 = vsel %vm252, %v670, 0
    %v674 = vsel %vm256, %v667, 0
    %676 = vmatprep.subr.mxu0 0.0
    %677 = vmatpush1.msra.mxu0 0.0
    %678 = vmatprep.subr.mxu0 0.0
    %679 = vmatpush1.msra.mxu0 0.0
    %680 = vmatprep.subr.mxu0 0.0
    %681 = vmatpush1.msra.mxu0 0.0
    %682 = vmatprep.subr.mxu0 0.0
    %683 = vmatpush1.msra.mxu0 0.0
    %684 = vmatprep.subr.mxu0 0.0
    %685 = vmatpush1.msra.mxu0 0.0
    %686 = vmatprep.subr.mxu0 0.0
    %687 = vmatpush1.msra.mxu0 0.0
    %688 = vmatprep.subr.mxu0 0.0
    %689 = vmatpush1.msra.mxu0 0.0
    %690 = vmatprep.subr.mxu0 0.0
    %691 = vmatpush1.msra.mxu0 0.0
    %692 = vmatprep.subr.mxu0 0.0
    %693 = vmatpush1.msra.mxu0 0.0
    %694 = vmatprep.subr.mxu0 0.0
    %695 = vmatpush1.msra.mxu0 0.0
    %696 = vmatprep.subr.mxu0 0.0
    %697 = vmatpush1.msra.mxu0 0.0
    %698 = vmatprep.subr.mxu0 0.0
    %699 = vmatpush1.msra.mxu0 0.0
    %700 = vmatprep.subr.mxu0 0.0
    %701 = vmatpush1.msra.mxu0 0.0
    %702 = vmatprep.subr.mxu0 0.0
    %703 = vmatpush1.msra.mxu0 0.0
    %704 = vmatprep.subr.mxu0 0.0
    %705 = vmatpush1.msra.mxu0 0.0
    %706 = vmatprep.subr.mxu0 0.0
    %707 = vmatpush1.msra.mxu0 %v674
    %708 = vmatprep.subr.mxu0 0.0
    %709 = vmatpush2.msra.mxu0 0.0
    %710 = vmatprep.subr.mxu0 0.0
    %711 = vmatpush2.msra.mxu0 0.0
    %712 = vmatprep.subr.mxu0 0.0
    %713 = vmatpush2.msra.mxu0 0.0
    %714 = vmatprep.subr.mxu0 0.0
    %715 = vmatpush2.msra.mxu0 0.0
    %716 = vmatprep.subr.mxu0 0.0
    %717 = vmatpush2.msra.mxu0 0.0
    %718 = vmatprep.subr.mxu0 0.0
    %719 = vmatpush2.msra.mxu0 0.0
    %720 = vmatprep.subr.mxu0 0.0
    %721 = vmatpush2.msra.mxu0 0.0
    %722 = vmatprep.subr.mxu0 0.0
    %723 = vmatpush2.msra.mxu0 0.0
    %724 = vmatprep.subr.mxu0 0.0
    %725 = vmatpush2.msra.mxu0 0.0
    %726 = vmatprep.subr.mxu0 0.0
    %727 = vmatpush2.msra.mxu0 0.0
    %728 = vmatprep.subr.mxu0 0.0
    %729 = vmatpush2.msra.mxu0 0.0
    %730 = vmatprep.subr.mxu0 0.0
    %731 = vmatpush2.msra.mxu0 0.0
    %732 = vmatprep.subr.mxu0 0.0
    %733 = vmatpush2.msra.mxu0 0.0
    %734 = vmatprep.subr.mxu0 0.0
    %735 = vmatpush2.msra.mxu0 0.0
    %736 = vmatprep.subr.mxu0 0.0
    %737 = vmatpush2.msra.mxu0 0.0
    %738 = vmatprep.subr.mxu0 0.0
    %739 = vmatpush2.msra.mxu0 0.0
    %740 = vmatprep.mubr.f32.mxu0 0.0
    %741 = vmatmul.mubr.f32.gmra.mxu0 %v671
    %v742 = vpop.f32.mrf.mxu0
    %v743 = vadd.f32 0.0, %v742
    %v744 = vpop.f32.mrf.mxu0
    %745 = vdwg.mxu0
    %v746 = vadd.f32 %v661, %v743
    %vm747 = vcmp.gt.f32.partialorder %v746, 20.0
    %v748 = vmin.f32 %v746, 20.0
    %v749 = vmul.f32 %v748, 1.442695
    %v750 = vpow.pop %v749
    %v751 = vadd.f32 %v750, 1.0
    %v752 = vlog2.pop %v751
    %v753 = vmul.f32 %v752, 0.6931472
    %v754 = vmul.f32 -0.5, %v750
    %v755 = vadd.f32 %v754, 1.0
    %v756 = vmul.f32 %v755, %v750
    %v757 = vand.u32 2147483647, %v750
    %vm758 = vcmp.lt.f32.partialorder %v757, 0.0004427343
    %v759 = vsel %vm758, %v756, %v753
    %v760 = vsel %vm747, %v746, %v759
    %vm761 = vcmp.gt.f32.partialorder %v555, 20.0
    %v762 = vmin.f32 %v555, 20.0
    %v763 = vmul.f32 %v762, 1.442695
    %v764 = vpow.pop %v763
    %v765 = vadd.f32 %v764, 1.0
    %v766 = vlog2.pop %v765
    %v767 = vmul.f32 %v766, 0.6931472
    %v768 = vmul.f32 -0.5, %v764
    %v769 = vadd.f32 %v768, 1.0
    %v770 = vmul.f32 %v769, %v764
    %v771 = vand.u32 2147483647, %v764
    %vm772 = vcmp.lt.f32.partialorder %v771, 0.0004427343
    %v773 = vsel %vm772, %v770, %v767
    %v774 = vsel %vm761, %v555, %v773
    %v775 = vld [vmem:[#allocation9] sm:$0xff]
    %v776 = vld [vmem:[#allocation9 + $0x8] sm:$0xff]
    %v777 = vld [vmem:[#allocation9 + $0x10] sm:$0xff]
    %v778 = vld [vmem:[#allocation9 + $0x18] sm:$0xff]
    %v779 = vld [vmem:[#allocation9 + $0x20] sm:$0xff]
    %v780 = vld [vmem:[#allocation9 + $0x28] sm:$0xff]
    %v781 = vld [vmem:[#allocation9 + $0x30] sm:$0xff]
    %v782 = vld [vmem:[#allocation9 + $0x38] sm:$0xff]
    %v783 = vld [vmem:[#allocation9 + $0x40] sm:$0xff]
    %v784 = vld [vmem:[#allocation9 + $0x48] sm:$0xff]
    %v785 = vld [vmem:[#allocation9 + $0x50] sm:$0xff]
    %v786 = vld [vmem:[#allocation9 + $0x58] sm:$0xff]
    %v787 = vld [vmem:[#allocation9 + $0x60] sm:$0x3]
    %v788 = vld [vmem:[#allocation9 + $0x68] sm:$0x3]
    %v789 = vld [vmem:[#allocation10] sm:$0x3]
    %v791 = vlaneseq
    %v792 = vshrl.u32 %v791, 7
    %v793 = vsub.s32 0, %v792
    %v794 = vrot.slane %v789, %v793
    %v795 = vlaneseq
    %v796 = vshrl.u32 %v795, 7
    %v797 = vsub.s32 1, %v796
    %v798 = vrot.slane %v789, %v797
    %802 = vrot.lane.b32.xlu0 %v570, 24
    %v803 = vpop.permute.xlu0 %802
    %804 = vrot.lane.b32.xlu0 %v774, 24
    %v805 = vpop.permute.xlu0 %804
    %vm806 = vcmask 195584
    %v807 = vsel %vm806, %v803, %v805
    %v808 = vsel %vm476, %v807, 0
    %v811 = vsel %vm479, %v787, 0
    %v814 = vsel %vm479, %v788, 0
    %816 = vmatprep.subr.mxu0 0.0
    %817 = vmatpush1.msra.mxu0 0.0
    %818 = vmatprep.subr.mxu0 0.0
    %819 = vmatpush1.msra.mxu0 0.0
    %820 = vmatprep.subr.mxu0 0.0
    %821 = vmatpush1.msra.mxu0 0.0
    %822 = vmatprep.subr.mxu0 0.0
    %823 = vmatpush1.msra.mxu0 0.0
    %824 = vmatprep.subr.mxu0 0.0
    %825 = vmatpush1.msra.mxu0 0.0
    %826 = vmatprep.subr.mxu0 0.0
    %827 = vmatpush1.msra.mxu0 0.0
    %828 = vmatprep.subr.mxu0 0.0
    %829 = vmatpush1.msra.mxu0 0.0
    %830 = vmatprep.subr.mxu0 0.0
    %831 = vmatpush1.msra.mxu0 0.0
    %832 = vmatprep.subr.mxu0 0.0
    %833 = vmatpush1.msra.mxu0 0.0
    %834 = vmatprep.subr.mxu0 %v814
    %835 = vmatpush1.msra.mxu0 %v811
    %836 = vmatprep.subr.mxu0 %v786
    %837 = vmatpush1.msra.mxu0 %v785
    %838 = vmatprep.subr.mxu0 %v784
    %839 = vmatpush1.msra.mxu0 %v783
    %840 = vmatprep.subr.mxu0 %v782
    %841 = vmatpush1.msra.mxu0 %v781
    %842 = vmatprep.subr.mxu0 %v780
    %843 = vmatpush1.msra.mxu0 %v779
    %844 = vmatprep.subr.mxu0 %v778
    %845 = vmatpush1.msra.mxu0 %v777
    %846 = vmatprep.subr.mxu0 %v776
    %847 = vmatpush1.msra.mxu0 %v775
    %848 = vmatprep.subr.mxu0 0.0
    %849 = vmatpush2.msra.mxu0 0.0
    %850 = vmatprep.subr.mxu0 0.0
    %851 = vmatpush2.msra.mxu0 0.0
    %852 = vmatprep.subr.mxu0 0.0
    %853 = vmatpush2.msra.mxu0 0.0
    %854 = vmatprep.subr.mxu0 0.0
    %855 = vmatpush2.msra.mxu0 0.0
    %856 = vmatprep.subr.mxu0 0.0
    %857 = vmatpush2.msra.mxu0 0.0
    %858 = vmatprep.subr.mxu0 0.0
    %859 = vmatpush2.msra.mxu0 0.0
    %860 = vmatprep.subr.mxu0 0.0
    %861 = vmatpush2.msra.mxu0 0.0
    %862 = vmatprep.subr.mxu0 0.0
    %863 = vmatpush2.msra.mxu0 0.0
    %864 = vmatprep.subr.mxu0 0.0
    %865 = vmatpush2.msra.mxu0 0.0
    %866 = vmatprep.subr.mxu0 0.0
    %867 = vmatpush2.msra.mxu0 0.0
    %868 = vmatprep.subr.mxu0 0.0
    %869 = vmatpush2.msra.mxu0 0.0
    %870 = vmatprep.subr.mxu0 0.0
    %871 = vmatpush2.msra.mxu0 0.0
    %872 = vmatprep.subr.mxu0 0.0
    %873 = vmatpush2.msra.mxu0 0.0
    %874 = vmatprep.subr.mxu0 0.0
    %875 = vmatpush2.msra.mxu0 0.0
    %876 = vmatprep.subr.mxu0 0.0
    %877 = vmatpush2.msra.mxu0 0.0
    %878 = vmatprep.subr.mxu0 0.0
    %879 = vmatpush2.msra.mxu0 0.0
    %880 = vmatprep.mubr.f32.mxu0 0.0
    %881 = vmatmul.mubr.f32.gmra.mxu0 %v808
    %v882 = vpop.f32.mrf.mxu0
    %v883 = vadd.f32 %v794, %v882
    %v884 = vpop.f32.mrf.mxu0
    %v885 = vadd.f32 %v798, %v884
    %886 = vdwg.mxu0
    %vm887 = vcmp.gt.f32.partialorder %v883, 20.0
    %v888 = vmin.f32 %v883, 20.0
    %v889 = vmul.f32 %v888, 1.442695
    %v890 = vpow.pop %v889
    %v891 = vadd.f32 %v890, 1.0
    %v892 = vlog2.pop %v891
    %v893 = vmul.f32 %v892, 0.6931472
    %v894 = vmul.f32 -0.5, %v890
    %v895 = vadd.f32 %v894, 1.0
    %v896 = vmul.f32 %v895, %v890
    %v897 = vand.u32 2147483647, %v890
    %vm898 = vcmp.lt.f32.partialorder %v897, 0.0004427343
    %v899 = vsel %vm898, %v896, %v893
    %v900 = vsel %vm887, %v883, %v899
    %902 = vrot.lane.b32.xlu0 %v900, 78
    %v903 = vpop.permute.xlu0 %902
    %v905 = vmul.f32 %v760, %v903
    %v906 = vld [vmem:[#allocation12] sm:$0xff]
    %v907 = vld [vmem:[#allocation12 + $0x8] sm:$0xff]
    %v908 = vld [vmem:[#allocation12 + $0x10] sm:$0xff]
    %v909 = vld [vmem:[#allocation12 + $0x18] sm:$0xff]
    %v910 = vld [vmem:[#allocation12 + $0x20] sm:$0xff]
    %v911 = vld [vmem:[#allocation12 + $0x28] sm:$0xff]
    %v912 = vld [vmem:[#allocation12 + $0x30] sm:$0x3]
    %v914 = vsel %vm476, %v905, 0
    %v917 = vsel %vm479, %v912, 0
    %919 = vmatprep.subr.mxu0 0.0
    %920 = vmatpush1.msra.mxu0 0.0
    %921 = vmatprep.subr.mxu0 0.0
    %922 = vmatpush1.msra.mxu0 0.0
    %923 = vmatprep.subr.mxu0 0.0
    %924 = vmatpush1.msra.mxu0 0.0
    %925 = vmatprep.subr.mxu0 0.0
    %926 = vmatpush1.msra.mxu0 0.0
    %927 = vmatprep.subr.mxu0 0.0
    %928 = vmatpush1.msra.mxu0 0.0
    %929 = vmatprep.subr.mxu0 0.0
    %930 = vmatpush1.msra.mxu0 0.0
    %931 = vmatprep.subr.mxu0 0.0
    %932 = vmatpush1.msra.mxu0 0.0
    %933 = vmatprep.subr.mxu0 0.0
    %934 = vmatpush1.msra.mxu0 0.0
    %935 = vmatprep.subr.mxu0 0.0
    %936 = vmatpush1.msra.mxu0 0.0
    %937 = vmatprep.subr.mxu0 0.0
    %938 = vmatpush1.msra.mxu0 %v917
    %939 = vmatprep.subr.mxu0 0.0
    %940 = vmatpush1.msra.mxu0 %v911
    %941 = vmatprep.subr.mxu0 0.0
    %942 = vmatpush1.msra.mxu0 %v910
    %943 = vmatprep.subr.mxu0 0.0
    %944 = vmatpush1.msra.mxu0 %v909
    %945 = vmatprep.subr.mxu0 0.0
    %946 = vmatpush1.msra.mxu0 %v908
    %947 = vmatprep.subr.mxu0 0.0
    %948 = vmatpush1.msra.mxu0 %v907
    %949 = vmatprep.subr.mxu0 0.0
    %950 = vmatpush1.msra.mxu0 %v906
    %951 = vmatprep.subr.mxu0 0.0
    %952 = vmatpush2.msra.mxu0 0.0
    %953 = vmatprep.subr.mxu0 0.0
    %954 = vmatpush2.msra.mxu0 0.0
    %955 = vmatprep.subr.mxu0 0.0
    %956 = vmatpush2.msra.mxu0 0.0
    %957 = vmatprep.subr.mxu0 0.0
    %958 = vmatpush2.msra.mxu0 0.0
    %959 = vmatprep.subr.mxu0 0.0
    %960 = vmatpush2.msra.mxu0 0.0
    %961 = vmatprep.subr.mxu0 0.0
    %962 = vmatpush2.msra.mxu0 0.0
    %963 = vmatprep.subr.mxu0 0.0
    %964 = vmatpush2.msra.mxu0 0.0
    %965 = vmatprep.subr.mxu0 0.0
    %966 = vmatpush2.msra.mxu0 0.0
    %967 = vmatprep.subr.mxu0 0.0
    %968 = vmatpush2.msra.mxu0 0.0
    %969 = vmatprep.subr.mxu0 0.0
    %970 = vmatpush2.msra.mxu0 0.0
    %971 = vmatprep.subr.mxu0 0.0
    %972 = vmatpush2.msra.mxu0 0.0
    %973 = vmatprep.subr.mxu0 0.0
    %974 = vmatpush2.msra.mxu0 0.0
    %975 = vmatprep.subr.mxu0 0.0
    %976 = vmatpush2.msra.mxu0 0.0
    %977 = vmatprep.subr.mxu0 0.0
    %978 = vmatpush2.msra.mxu0 0.0
    %979 = vmatprep.subr.mxu0 0.0
    %980 = vmatpush2.msra.mxu0 0.0
    %981 = vmatprep.subr.mxu0 0.0
    %982 = vmatpush2.msra.mxu0 0.0
    %983 = vmatprep.mubr.f32.mxu0 0.0
    %984 = vmatmul.mubr.f32.gmra.mxu0 %v914
    %v985 = vpop.f32.mrf.mxu0
    %v986 = vadd.f32 0.0, %v985
    %v987 = vpop.f32.mrf.mxu0
    %988 = vdwg.mxu0
    %v989 = vadd.f32 %v883, %v986
    %991 = vrot.lane.b32.xlu0 %v883, 32
    %v992 = vpop.permute.xlu0 %991
    %v994 = vmul.f32 %v243, %v992
    %v995 = vld [vmem:[%s11] sm:$0xf]
    %997 = vrot.lane.b32.xlu0 %v994, 124
    %v998 = vpop.permute.xlu0 %997
    %v999 = vsel %vm252, %v998, 0
    %v1002 = vsel %vm256, %v995, 0
    %1004 = vmatprep.subr.mxu0 0.0
    %1005 = vmatpush1.msra.mxu0 0.0
    %1006 = vmatprep.subr.mxu0 0.0
    %1007 = vmatpush1.msra.mxu0 0.0
    %1008 = vmatprep.subr.mxu0 0.0
    %1009 = vmatpush1.msra.mxu0 0.0
    %1010 = vmatprep.subr.mxu0 0.0
    %1011 = vmatpush1.msra.mxu0 0.0
    %1012 = vmatprep.subr.mxu0 0.0
    %1013 = vmatpush1.msra.mxu0 0.0
    %1014 = vmatprep.subr.mxu0 0.0
    %1015 = vmatpush1.msra.mxu0 0.0
    %1016 = vmatprep.subr.mxu0 0.0
    %1017 = vmatpush1.msra.mxu0 0.0
    %1018 = vmatprep.subr.mxu0 0.0
    %1019 = vmatpush1.msra.mxu0 0.0
    %1020 = vmatprep.subr.mxu0 0.0
    %1021 = vmatpush1.msra.mxu0 0.0
    %1022 = vmatprep.subr.mxu0 0.0
    %1023 = vmatpush1.msra.mxu0 0.0
    %1024 = vmatprep.subr.mxu0 0.0
    %1025 = vmatpush1.msra.mxu0 0.0
    %1026 = vmatprep.subr.mxu0 0.0
    %1027 = vmatpush1.msra.mxu0 0.0
    %1028 = vmatprep.subr.mxu0 0.0
    %1029 = vmatpush1.msra.mxu0 0.0
    %1030 = vmatprep.subr.mxu0 0.0
    %1031 = vmatpush1.msra.mxu0 0.0
    %1032 = vmatprep.subr.mxu0 0.0
    %1033 = vmatpush1.msra.mxu0 0.0
    %1034 = vmatprep.subr.mxu0 0.0
    %1035 = vmatpush1.msra.mxu0 %v1002
    %1036 = vmatprep.subr.mxu0 0.0
    %1037 = vmatpush2.msra.mxu0 0.0
    %1038 = vmatprep.subr.mxu0 0.0
    %1039 = vmatpush2.msra.mxu0 0.0
    %1040 = vmatprep.subr.mxu0 0.0
    %1041 = vmatpush2.msra.mxu0 0.0
    %1042 = vmatprep.subr.mxu0 0.0
    %1043 = vmatpush2.msra.mxu0 0.0
    %1044 = vmatprep.subr.mxu0 0.0
    %1045 = vmatpush2.msra.mxu0 0.0
    %1046 = vmatprep.subr.mxu0 0.0
    %1047 = vmatpush2.msra.mxu0 0.0
    %1048 = vmatprep.subr.mxu0 0.0
    %1049 = vmatpush2.msra.mxu0 0.0
    %1050 = vmatprep.subr.mxu0 0.0
    %1051 = vmatpush2.msra.mxu0 0.0
    %1052 = vmatprep.subr.mxu0 0.0
    %1053 = vmatpush2.msra.mxu0 0.0
    %1054 = vmatprep.subr.mxu0 0.0
    %1055 = vmatpush2.msra.mxu0 0.0
    %1056 = vmatprep.subr.mxu0 0.0
    %1057 = vmatpush2.msra.mxu0 0.0
    %1058 = vmatprep.subr.mxu0 0.0
    %1059 = vmatpush2.msra.mxu0 0.0
    %1060 = vmatprep.subr.mxu0 0.0
    %1061 = vmatpush2.msra.mxu0 0.0
    %1062 = vmatprep.subr.mxu0 0.0
    %1063 = vmatpush2.msra.mxu0 0.0
    %1064 = vmatprep.subr.mxu0 0.0
    %1065 = vmatpush2.msra.mxu0 0.0
    %1066 = vmatprep.subr.mxu0 0.0
    %1067 = vmatpush2.msra.mxu0 0.0
    %1068 = vmatprep.mubr.f32.mxu0 0.0
    %1069 = vmatmul.mubr.f32.gmra.mxu0 %v999
    %v1070 = vpop.f32.mrf.mxu0
    %v1071 = vadd.f32 0.0, %v1070
    %v1072 = vpop.f32.mrf.mxu0
    %1073 = vdwg.mxu0
    %v1074 = vadd.f32 %v989, %v1071
    %vm1075 = vcmp.gt.f32.partialorder %v1074, 20.0
    %v1076 = vmin.f32 %v1074, 20.0
    %v1077 = vmul.f32 %v1076, 1.442695
    %v1078 = vpow.pop %v1077
    %v1079 = vadd.f32 %v1078, 1.0
    %v1080 = vlog2.pop %v1079
    %v1081 = vmul.f32 %v1080, 0.6931472
    %v1082 = vmul.f32 -0.5, %v1078
    %v1083 = vadd.f32 %v1082, 1.0
    %v1084 = vmul.f32 %v1083, %v1078
    %v1085 = vand.u32 2147483647, %v1078
    %vm1086 = vcmp.lt.f32.partialorder %v1085, 0.0004427343
    %v1087 = vsel %vm1086, %v1084, %v1081
    %v1088 = vsel %vm1075, %v1074, %v1087
    %vm1089 = vcmp.gt.f32.partialorder %v885, 20.0
    %v1090 = vmin.f32 %v885, 20.0
    %v1091 = vmul.f32 %v1090, 1.442695
    %v1092 = vpow.pop %v1091
    %v1093 = vadd.f32 %v1092, 1.0
    %v1094 = vlog2.pop %v1093
    %v1095 = vmul.f32 %v1094, 0.6931472
    %v1096 = vmul.f32 -0.5, %v1092
    %v1097 = vadd.f32 %v1096, 1.0
    %v1098 = vmul.f32 %v1097, %v1092
    %v1099 = vand.u32 2147483647, %v1092
    %vm1100 = vcmp.lt.f32.partialorder %v1099, 0.0004427343
    %v1101 = vsel %vm1100, %v1098, %v1095
    %v1102 = vsel %vm1089, %v885, %v1101
    %v1103 = vld [vmem:[#allocation13] sm:$0xff]
    %v1104 = vld [vmem:[#allocation13 + $0x8] sm:$0xff]
    %v1105 = vld [vmem:[#allocation13 + $0x10] sm:$0xff]
    %v1106 = vld [vmem:[#allocation13 + $0x18] sm:$0xff]
    %v1107 = vld [vmem:[#allocation13 + $0x20] sm:$0xff]
    %v1108 = vld [vmem:[#allocation13 + $0x28] sm:$0xff]
    %v1109 = vld [vmem:[#allocation13 + $0x30] sm:$0xff]
    %v1110 = vld [vmem:[#allocation13 + $0x38] sm:$0xff]
    %v1111 = vld [vmem:[#allocation13 + $0x40] sm:$0xff]
    %v1112 = vld [vmem:[#allocation13 + $0x48] sm:$0xff]
    %v1113 = vld [vmem:[#allocation13 + $0x50] sm:$0xff]
    %v1114 = vld [vmem:[#allocation13 + $0x58] sm:$0xff]
    %v1115 = vld [vmem:[#allocation13 + $0x60] sm:$0x3]
    %v1116 = vld [vmem:[#allocation13 + $0x68] sm:$0x3]
    %v1117 = vld [vmem:[#allocation15] sm:$0x3]
    %v1119 = vlaneseq
    %v1120 = vshrl.u32 %v1119, 7
    %v1121 = vsub.s32 0, %v1120
    %v1122 = vrot.slane %v1117, %v1121
    %v1123 = vlaneseq
    %v1124 = vshrl.u32 %v1123, 7
    %v1125 = vsub.s32 1, %v1124
    %v1126 = vrot.slane %v1117, %v1125
    %1130 = vrot.lane.b32.xlu0 %v900, 24
    %v1131 = vpop.permute.xlu0 %1130
    %1132 = vrot.lane.b32.xlu0 %v1102, 24
    %v1133 = vpop.permute.xlu0 %1132
    %v1134 = vsel %vm806, %v1131, %v1133
    %v1135 = vsel %vm476, %v1134, 0
    %v1138 = vsel %vm479, %v1115, 0
    %v1141 = vsel %vm479, %v1116, 0
    %1143 = vmatprep.subr.mxu0 0.0
    %1144 = vmatpush1.msra.mxu0 0.0
    %1145 = vmatprep.subr.mxu0 0.0
    %1146 = vmatpush1.msra.mxu0 0.0
    %1147 = vmatprep.subr.mxu0 0.0
    %1148 = vmatpush1.msra.mxu0 0.0
    %1149 = vmatprep.subr.mxu0 0.0
    %1150 = vmatpush1.msra.mxu0 0.0
    %1151 = vmatprep.subr.mxu0 0.0
    %1152 = vmatpush1.msra.mxu0 0.0
    %1153 = vmatprep.subr.mxu0 0.0
    %1154 = vmatpush1.msra.mxu0 0.0
    %1155 = vmatprep.subr.mxu0 0.0
    %1156 = vmatpush1.msra.mxu0 0.0
    %1157 = vmatprep.subr.mxu0 0.0
    %1158 = vmatpush1.msra.mxu0 0.0
    %1159 = vmatprep.subr.mxu0 0.0
    %1160 = vmatpush1.msra.mxu0 0.0
    %1161 = vmatprep.subr.mxu0 %v1141
    %1162 = vmatpush1.msra.mxu0 %v1138
    %1163 = vmatprep.subr.mxu0 %v1114
    %1164 = vmatpush1.msra.mxu0 %v1113
    %1165 = vmatprep.subr.mxu0 %v1112
    %1166 = vmatpush1.msra.mxu0 %v1111
    %1167 = vmatprep.subr.mxu0 %v1110
    %1168 = vmatpush1.msra.mxu0 %v1109
    %1169 = vmatprep.subr.mxu0 %v1108
    %1170 = vmatpush1.msra.mxu0 %v1107
    %1171 = vmatprep.subr.mxu0 %v1106
    %1172 = vmatpush1.msra.mxu0 %v1105
    %1173 = vmatprep.subr.mxu0 %v1104
    %1174 = vmatpush1.msra.mxu0 %v1103
    %1175 = vmatprep.subr.mxu0 0.0
    %1176 = vmatpush2.msra.mxu0 0.0
    %1177 = vmatprep.subr.mxu0 0.0
    %1178 = vmatpush2.msra.mxu0 0.0
    %1179 = vmatprep.subr.mxu0 0.0
    %1180 = vmatpush2.msra.mxu0 0.0
    %1181 = vmatprep.subr.mxu0 0.0
    %1182 = vmatpush2.msra.mxu0 0.0
    %1183 = vmatprep.subr.mxu0 0.0
    %1184 = vmatpush2.msra.mxu0 0.0
    %1185 = vmatprep.subr.mxu0 0.0
    %1186 = vmatpush2.msra.mxu0 0.0
    %1187 = vmatprep.subr.mxu0 0.0
    %1188 = vmatpush2.msra.mxu0 0.0
    %1189 = vmatprep.subr.mxu0 0.0
    %1190 = vmatpush2.msra.mxu0 0.0
    %1191 = vmatprep.subr.mxu0 0.0
    %1192 = vmatpush2.msra.mxu0 0.0
    %1193 = vmatprep.subr.mxu0 0.0
    %1194 = vmatpush2.msra.mxu0 0.0
    %1195 = vmatprep.subr.mxu0 0.0
    %1196 = vmatpush2.msra.mxu0 0.0
    %1197 = vmatprep.subr.mxu0 0.0
    %1198 = vmatpush2.msra.mxu0 0.0
    %1199 = vmatprep.subr.mxu0 0.0
    %1200 = vmatpush2.msra.mxu0 0.0
    %1201 = vmatprep.subr.mxu0 0.0
    %1202 = vmatpush2.msra.mxu0 0.0
    %1203 = vmatprep.subr.mxu0 0.0
    %1204 = vmatpush2.msra.mxu0 0.0
    %1205 = vmatprep.subr.mxu0 0.0
    %1206 = vmatpush2.msra.mxu0 0.0
    %1207 = vmatprep.mubr.f32.mxu0 0.0
    %1208 = vmatmul.mubr.f32.gmra.mxu0 %v1135
    %v1209 = vpop.f32.mrf.mxu0
    %v1210 = vadd.f32 %v1122, %v1209
    %v1211 = vpop.f32.mrf.mxu0
    %v1212 = vadd.f32 %v1126, %v1211
    %1213 = vdwg.mxu0
    %vm1214 = vcmp.gt.f32.partialorder %v1210, 20.0
    %v1215 = vmin.f32 %v1210, 20.0
    %v1216 = vmul.f32 %v1215, 1.442695
    %v1217 = vpow.pop %v1216
    %v1218 = vadd.f32 %v1217, 1.0
    %v1219 = vlog2.pop %v1218
    %v1220 = vmul.f32 %v1219, 0.6931472
    %v1221 = vmul.f32 -0.5, %v1217
    %v1222 = vadd.f32 %v1221, 1.0
    %v1223 = vmul.f32 %v1222, %v1217
    %v1224 = vand.u32 2147483647, %v1217
    %vm1225 = vcmp.lt.f32.partialorder %v1224, 0.0004427343
    %v1226 = vsel %vm1225, %v1223, %v1220
    %v1227 = vsel %vm1214, %v1210, %v1226
    %1229 = vrot.lane.b32.xlu0 %v1227, 78
    %v1230 = vpop.permute.xlu0 %1229
    %v1232 = vmul.f32 %v1088, %v1230
    %v1233 = vld [vmem:[#allocation16] sm:$0xff]
    %v1234 = vld [vmem:[#allocation16 + $0x8] sm:$0xff]
    %v1235 = vld [vmem:[#allocation16 + $0x10] sm:$0xff]
    %v1236 = vld [vmem:[#allocation16 + $0x18] sm:$0xff]
    %v1237 = vld [vmem:[#allocation16 + $0x20] sm:$0xff]
    %v1238 = vld [vmem:[#allocation16 + $0x28] sm:$0xff]
    %v1239 = vld [vmem:[#allocation16 + $0x30] sm:$0x3]
    %v1241 = vsel %vm476, %v1232, 0
    %v1244 = vsel %vm479, %v1239, 0
    %1246 = vmatprep.subr.mxu0 0.0
    %1247 = vmatpush1.msra.mxu0 0.0
    %1248 = vmatprep.subr.mxu0 0.0
    %1249 = vmatpush1.msra.mxu0 0.0
    %1250 = vmatprep.subr.mxu0 0.0
    %1251 = vmatpush1.msra.mxu0 0.0
    %1252 = vmatprep.subr.mxu0 0.0
    %1253 = vmatpush1.msra.mxu0 0.0
    %1254 = vmatprep.subr.mxu0 0.0
    %1255 = vmatpush1.msra.mxu0 0.0
    %1256 = vmatprep.subr.mxu0 0.0
    %1257 = vmatpush1.msra.mxu0 0.0
    %1258 = vmatprep.subr.mxu0 0.0
    %1259 = vmatpush1.msra.mxu0 0.0
    %1260 = vmatprep.subr.mxu0 0.0
    %1261 = vmatpush1.msra.mxu0 0.0
    %1262 = vmatprep.subr.mxu0 0.0
    %1263 = vmatpush1.msra.mxu0 0.0
    %1264 = vmatprep.subr.mxu0 0.0
    %1265 = vmatpush1.msra.mxu0 %v1244
    %1266 = vmatprep.subr.mxu0 0.0
    %1267 = vmatpush1.msra.mxu0 %v1238
    %1268 = vmatprep.subr.mxu0 0.0
    %1269 = vmatpush1.msra.mxu0 %v1237
    %1270 = vmatprep.subr.mxu0 0.0
    %1271 = vmatpush1.msra.mxu0 %v1236
    %1272 = vmatprep.subr.mxu0 0.0
    %1273 = vmatpush1.msra.mxu0 %v1235
    %1274 = vmatprep.subr.mxu0 0.0
    %1275 = vmatpush1.msra.mxu0 %v1234
    %1276 = vmatprep.subr.mxu0 0.0
    %1277 = vmatpush1.msra.mxu0 %v1233
    %1278 = vmatprep.subr.mxu0 0.0
    %1279 = vmatpush2.msra.mxu0 0.0
    %1280 = vmatprep.subr.mxu0 0.0
    %1281 = vmatpush2.msra.mxu0 0.0
    %1282 = vmatprep.subr.mxu0 0.0
    %1283 = vmatpush2.msra.mxu0 0.0
    %1284 = vmatprep.subr.mxu0 0.0
    %1285 = vmatpush2.msra.mxu0 0.0
    %1286 = vmatprep.subr.mxu0 0.0
    %1287 = vmatpush2.msra.mxu0 0.0
    %1288 = vmatprep.subr.mxu0 0.0
    %1289 = vmatpush2.msra.mxu0 0.0
    %1290 = vmatprep.subr.mxu0 0.0
    %1291 = vmatpush2.msra.mxu0 0.0
    %1292 = vmatprep.subr.mxu0 0.0
    %1293 = vmatpush2.msra.mxu0 0.0
    %1294 = vmatprep.subr.mxu0 0.0
    %1295 = vmatpush2.msra.mxu0 0.0
    %1296 = vmatprep.subr.mxu0 0.0
    %1297 = vmatpush2.msra.mxu0 0.0
    %1298 = vmatprep.subr.mxu0 0.0
    %1299 = vmatpush2.msra.mxu0 0.0
    %1300 = vmatprep.subr.mxu0 0.0
    %1301 = vmatpush2.msra.mxu0 0.0
    %1302 = vmatprep.subr.mxu0 0.0
    %1303 = vmatpush2.msra.mxu0 0.0
    %1304 = vmatprep.subr.mxu0 0.0
    %1305 = vmatpush2.msra.mxu0 0.0
    %1306 = vmatprep.subr.mxu0 0.0
    %1307 = vmatpush2.msra.mxu0 0.0
    %1308 = vmatprep.subr.mxu0 0.0
    %1309 = vmatpush2.msra.mxu0 0.0
    %1310 = vmatprep.mubr.f32.mxu0 0.0
    %1311 = vmatmul.mubr.f32.gmra.mxu0 %v1241
    %v1312 = vpop.f32.mrf.mxu0
    %v1313 = vadd.f32 0.0, %v1312
    %v1314 = vpop.f32.mrf.mxu0
    %1315 = vdwg.mxu0
    %v1316 = vadd.f32 %v1210, %v1313
    %1318 = vrot.lane.b32.xlu0 %v1210, 32
    %v1319 = vpop.permute.xlu0 %1318
    %v1321 = vmul.f32 %v243, %v1319
    %v1322 = vld [vmem:[%s15] sm:$0xf]
    %1324 = vrot.lane.b32.xlu0 %v1321, 124
    %v1325 = vpop.permute.xlu0 %1324
    %v1326 = vsel %vm252, %v1325, 0
    %v1329 = vsel %vm256, %v1322, 0
    %1331 = vmatprep.subr.mxu0 0.0
    %1332 = vmatpush1.msra.mxu0 0.0
    %1333 = vmatprep.subr.mxu0 0.0
    %1334 = vmatpush1.msra.mxu0 0.0
    %1335 = vmatprep.subr.mxu0 0.0
    %1336 = vmatpush1.msra.mxu0 0.0
    %1337 = vmatprep.subr.mxu0 0.0
    %1338 = vmatpush1.msra.mxu0 0.0
    %1339 = vmatprep.subr.mxu0 0.0
    %1340 = vmatpush1.msra.mxu0 0.0
    %1341 = vmatprep.subr.mxu0 0.0
    %1342 = vmatpush1.msra.mxu0 0.0
    %1343 = vmatprep.subr.mxu0 0.0
    %1344 = vmatpush1.msra.mxu0 0.0
    %1345 = vmatprep.subr.mxu0 0.0
    %1346 = vmatpush1.msra.mxu0 0.0
    %1347 = vmatprep.subr.mxu0 0.0
    %1348 = vmatpush1.msra.mxu0 0.0
    %1349 = vmatprep.subr.mxu0 0.0
    %1350 = vmatpush1.msra.mxu0 0.0
    %1351 = vmatprep.subr.mxu0 0.0
    %1352 = vmatpush1.msra.mxu0 0.0
    %1353 = vmatprep.subr.mxu0 0.0
    %1354 = vmatpush1.msra.mxu0 0.0
    %1355 = vmatprep.subr.mxu0 0.0
    %1356 = vmatpush1.msra.mxu0 0.0
    %1357 = vmatprep.subr.mxu0 0.0
    %1358 = vmatpush1.msra.mxu0 0.0
    %1359 = vmatprep.subr.mxu0 0.0
    %1360 = vmatpush1.msra.mxu0 0.0
    %1361 = vmatprep.subr.mxu0 0.0
    %1362 = vmatpush1.msra.mxu0 %v1329
    %1363 = vmatprep.subr.mxu0 0.0
    %1364 = vmatpush2.msra.mxu0 0.0
    %1365 = vmatprep.subr.mxu0 0.0
    %1366 = vmatpush2.msra.mxu0 0.0
    %1367 = vmatprep.subr.mxu0 0.0
    %1368 = vmatpush2.msra.mxu0 0.0
    %1369 = vmatprep.subr.mxu0 0.0
    %1370 = vmatpush2.msra.mxu0 0.0
    %1371 = vmatprep.subr.mxu0 0.0
    %1372 = vmatpush2.msra.mxu0 0.0
    %1373 = vmatprep.subr.mxu0 0.0
    %1374 = vmatpush2.msra.mxu0 0.0
    %1375 = vmatprep.subr.mxu0 0.0
    %1376 = vmatpush2.msra.mxu0 0.0
    %1377 = vmatprep.subr.mxu0 0.0
    %1378 = vmatpush2.msra.mxu0 0.0
    %1379 = vmatprep.subr.mxu0 0.0
    %1380 = vmatpush2.msra.mxu0 0.0
    %1381 = vmatprep.subr.mxu0 0.0
    %1382 = vmatpush2.msra.mxu0 0.0
    %1383 = vmatprep.subr.mxu0 0.0
    %1384 = vmatpush2.msra.mxu0 0.0
    %1385 = vmatprep.subr.mxu0 0.0
    %1386 = vmatpush2.msra.mxu0 0.0
    %1387 = vmatprep.subr.mxu0 0.0
    %1388 = vmatpush2.msra.mxu0 0.0
    %1389 = vmatprep.subr.mxu0 0.0
    %1390 = vmatpush2.msra.mxu0 0.0
    %1391 = vmatprep.subr.mxu0 0.0
    %1392 = vmatpush2.msra.mxu0 0.0
    %1393 = vmatprep.subr.mxu0 0.0
    %1394 = vmatpush2.msra.mxu0 0.0
    %1395 = vmatprep.mubr.f32.mxu0 0.0
    %1396 = vmatmul.mubr.f32.gmra.mxu0 %v1326
    %v1397 = vpop.f32.mrf.mxu0
    %v1398 = vadd.f32 0.0, %v1397
    %v1399 = vpop.f32.mrf.mxu0
    %1400 = vdwg.mxu0
    %v1401 = vadd.f32 %v1316, %v1398
    %vm1402 = vcmp.gt.f32.partialorder %v1401, 20.0
    %v1403 = vmin.f32 %v1401, 20.0
    %v1404 = vmul.f32 %v1403, 1.442695
    %v1405 = vpow.pop %v1404
    %v1406 = vadd.f32 %v1405, 1.0
    %v1407 = vlog2.pop %v1406
    %v1408 = vmul.f32 %v1407, 0.6931472
    %v1409 = vmul.f32 -0.5, %v1405
    %v1410 = vadd.f32 %v1409, 1.0
    %v1411 = vmul.f32 %v1410, %v1405
    %v1412 = vand.u32 2147483647, %v1405
    %vm1413 = vcmp.lt.f32.partialorder %v1412, 0.0004427343
    %v1414 = vsel %vm1413, %v1411, %v1408
    %v1415 = vsel %vm1402, %v1401, %v1414
    %vm1416 = vcmp.gt.f32.partialorder %v1212, 20.0
    %v1417 = vmin.f32 %v1212, 20.0
    %v1418 = vmul.f32 %v1417, 1.442695
    %v1419 = vpow.pop %v1418
    %v1420 = vadd.f32 %v1419, 1.0
    %v1421 = vlog2.pop %v1420
    %v1422 = vmul.f32 %v1421, 0.6931472
    %v1423 = vmul.f32 -0.5, %v1419
    %v1424 = vadd.f32 %v1423, 1.0
    %v1425 = vmul.f32 %v1424, %v1419
    %v1426 = vand.u32 2147483647, %v1419
    %vm1427 = vcmp.lt.f32.partialorder %v1426, 0.0004427343
    %v1428 = vsel %vm1427, %v1425, %v1422
    %v1429 = vsel %vm1416, %v1212, %v1428
    %v1430 = vld [vmem:[#allocation18] sm:$0xff]
    %v1431 = vld [vmem:[#allocation18 + $0x8] sm:$0xff]
    %v1432 = vld [vmem:[#allocation18 + $0x10] sm:$0xff]
    %v1433 = vld [vmem:[#allocation18 + $0x18] sm:$0xff]
    %v1434 = vld [vmem:[#allocation18 + $0x20] sm:$0xff]
    %v1435 = vld [vmem:[#allocation18 + $0x28] sm:$0xff]
    %v1436 = vld [vmem:[#allocation18 + $0x30] sm:$0xff]
    %v1437 = vld [vmem:[#allocation18 + $0x38] sm:$0xff]
    %v1438 = vld [vmem:[#allocation18 + $0x40] sm:$0xff]
    %v1439 = vld [vmem:[#allocation18 + $0x48] sm:$0xff]
    %v1440 = vld [vmem:[#allocation18 + $0x50] sm:$0xff]
    %v1441 = vld [vmem:[#allocation18 + $0x58] sm:$0xff]
    %v1442 = vld [vmem:[#allocation18 + $0x60] sm:$0x3]
    %v1443 = vld [vmem:[#allocation18 + $0x68] sm:$0x3]
    %v1444 = vld [vmem:[%s17] sm:$0x3]
    %v1446 = vlaneseq
    %v1447 = vshrl.u32 %v1446, 7
    %v1448 = vsub.s32 0, %v1447
    %v1449 = vrot.slane %v1444, %v1448
    %v1450 = vlaneseq
    %v1451 = vshrl.u32 %v1450, 7
    %v1452 = vsub.s32 1, %v1451
    %v1453 = vrot.slane %v1444, %v1452
    %1457 = vrot.lane.b32.xlu0 %v1227, 24
    %v1458 = vpop.permute.xlu0 %1457
    %1459 = vrot.lane.b32.xlu0 %v1429, 24
    %v1460 = vpop.permute.xlu0 %1459
    %v1461 = vsel %vm806, %v1458, %v1460
    %v1462 = vsel %vm476, %v1461, 0
    %v1465 = vsel %vm479, %v1442, 0
    %v1468 = vsel %vm479, %v1443, 0
    %1470 = vmatprep.subr.mxu0 0.0
    %1471 = vmatpush1.msra.mxu0 0.0
    %1472 = vmatprep.subr.mxu0 0.0
    %1473 = vmatpush1.msra.mxu0 0.0
    %1474 = vmatprep.subr.mxu0 0.0
    %1475 = vmatpush1.msra.mxu0 0.0
    %1476 = vmatprep.subr.mxu0 0.0
    %1477 = vmatpush1.msra.mxu0 0.0
    %1478 = vmatprep.subr.mxu0 0.0
    %1479 = vmatpush1.msra.mxu0 0.0
    %1480 = vmatprep.subr.mxu0 0.0
    %1481 = vmatpush1.msra.mxu0 0.0
    %1482 = vmatprep.subr.mxu0 0.0
    %1483 = vmatpush1.msra.mxu0 0.0
    %1484 = vmatprep.subr.mxu0 0.0
    %1485 = vmatpush1.msra.mxu0 0.0
    %1486 = vmatprep.subr.mxu0 0.0
    %1487 = vmatpush1.msra.mxu0 0.0
    %1488 = vmatprep.subr.mxu0 %v1468
    %1489 = vmatpush1.msra.mxu0 %v1465
    %1490 = vmatprep.subr.mxu0 %v1441
    %1491 = vmatpush1.msra.mxu0 %v1440
    %1492 = vmatprep.subr.mxu0 %v1439
    %1493 = vmatpush1.msra.mxu0 %v1438
    %1494 = vmatprep.subr.mxu0 %v1437
    %1495 = vmatpush1.msra.mxu0 %v1436
    %1496 = vmatprep.subr.mxu0 %v1435
    %1497 = vmatpush1.msra.mxu0 %v1434
    %1498 = vmatprep.subr.mxu0 %v1433
    %1499 = vmatpush1.msra.mxu0 %v1432
    %1500 = vmatprep.subr.mxu0 %v1431
    %1501 = vmatpush1.msra.mxu0 %v1430
    %1502 = vmatprep.subr.mxu0 0.0
    %1503 = vmatpush2.msra.mxu0 0.0
    %1504 = vmatprep.subr.mxu0 0.0
    %1505 = vmatpush2.msra.mxu0 0.0
    %1506 = vmatprep.subr.mxu0 0.0
    %1507 = vmatpush2.msra.mxu0 0.0
    %1508 = vmatprep.subr.mxu0 0.0
    %1509 = vmatpush2.msra.mxu0 0.0
    %1510 = vmatprep.subr.mxu0 0.0
    %1511 = vmatpush2.msra.mxu0 0.0
    %1512 = vmatprep.subr.mxu0 0.0
    %1513 = vmatpush2.msra.mxu0 0.0
    %1514 = vmatprep.subr.mxu0 0.0
    %1515 = vmatpush2.msra.mxu0 0.0
    %1516 = vmatprep.subr.mxu0 0.0
    %1517 = vmatpush2.msra.mxu0 0.0
    %1518 = vmatprep.subr.mxu0 0.0
    %1519 = vmatpush2.msra.mxu0 0.0
    %1520 = vmatprep.subr.mxu0 0.0
    %1521 = vmatpush2.msra.mxu0 0.0
    %1522 = vmatprep.subr.mxu0 0.0
    %1523 = vmatpush2.msra.mxu0 0.0
    %1524 = vmatprep.subr.mxu0 0.0
    %1525 = vmatpush2.msra.mxu0 0.0
    %1526 = vmatprep.subr.mxu0 0.0
    %1527 = vmatpush2.msra.mxu0 0.0
    %1528 = vmatprep.subr.mxu0 0.0
    %1529 = vmatpush2.msra.mxu0 0.0
    %1530 = vmatprep.subr.mxu0 0.0
    %1531 = vmatpush2.msra.mxu0 0.0
    %1532 = vmatprep.subr.mxu0 0.0
    %1533 = vmatpush2.msra.mxu0 0.0
    %1534 = vmatprep.mubr.f32.mxu0 0.0
    %1535 = vmatmul.mubr.f32.gmra.mxu0 %v1462
    %v1536 = vpop.f32.mrf.mxu0
    %v1537 = vadd.f32 %v1449, %v1536
    %v1538 = vpop.f32.mrf.mxu0
    %v1539 = vadd.f32 %v1453, %v1538
    %1540 = vdwg.mxu0
    %vm1541 = vcmp.gt.f32.partialorder %v1537, 20.0
    %v1542 = vmin.f32 %v1537, 20.0
    %v1543 = vmul.f32 %v1542, 1.442695
    %v1544 = vpow.pop %v1543
    %v1545 = vadd.f32 %v1544, 1.0
    %v1546 = vlog2.pop %v1545
    %v1547 = vmul.f32 %v1546, 0.6931472
    %v1548 = vmul.f32 -0.5, %v1544
    %v1549 = vadd.f32 %v1548, 1.0
    %v1550 = vmul.f32 %v1549, %v1544
    %v1551 = vand.u32 2147483647, %v1544
    %vm1552 = vcmp.lt.f32.partialorder %v1551, 0.0004427343
    %v1553 = vsel %vm1552, %v1550, %v1547
    %v1554 = vsel %vm1541, %v1537, %v1553
    %1556 = vrot.lane.b32.xlu0 %v1554, 78
    %v1557 = vpop.permute.xlu0 %1556
    %v1559 = vmul.f32 %v1415, %v1557
    %v1560 = vld [vmem:[#allocation19] sm:$0xff]
    %v1561 = vld [vmem:[#allocation19 + $0x8] sm:$0xff]
    %v1562 = vld [vmem:[#allocation19 + $0x10] sm:$0xff]
    %v1563 = vld [vmem:[#allocation19 + $0x18] sm:$0xff]
    %v1564 = vld [vmem:[#allocation19 + $0x20] sm:$0xff]
    %v1565 = vld [vmem:[#allocation19 + $0x28] sm:$0xff]
    %v1566 = vld [vmem:[#allocation19 + $0x30] sm:$0x3]
    %v1568 = vsel %vm476, %v1559, 0
    %v1571 = vsel %vm479, %v1566, 0
    %1573 = vmatprep.subr.mxu0 0.0
    %1574 = vmatpush1.msra.mxu0 0.0
    %1575 = vmatprep.subr.mxu0 0.0
    %1576 = vmatpush1.msra.mxu0 0.0
    %1577 = vmatprep.subr.mxu0 0.0
    %1578 = vmatpush1.msra.mxu0 0.0
    %1579 = vmatprep.subr.mxu0 0.0
    %1580 = vmatpush1.msra.mxu0 0.0
    %1581 = vmatprep.subr.mxu0 0.0
    %1582 = vmatpush1.msra.mxu0 0.0
    %1583 = vmatprep.subr.mxu0 0.0
    %1584 = vmatpush1.msra.mxu0 0.0
    %1585 = vmatprep.subr.mxu0 0.0
    %1586 = vmatpush1.msra.mxu0 0.0
    %1587 = vmatprep.subr.mxu0 0.0
    %1588 = vmatpush1.msra.mxu0 0.0
    %1589 = vmatprep.subr.mxu0 0.0
    %1590 = vmatpush1.msra.mxu0 0.0
    %1591 = vmatprep.subr.mxu0 0.0
    %1592 = vmatpush1.msra.mxu0 %v1571
    %1593 = vmatprep.subr.mxu0 0.0
    %1594 = vmatpush1.msra.mxu0 %v1565
    %1595 = vmatprep.subr.mxu0 0.0
    %1596 = vmatpush1.msra.mxu0 %v1564
    %1597 = vmatprep.subr.mxu0 0.0
    %1598 = vmatpush1.msra.mxu0 %v1563
    %1599 = vmatprep.subr.mxu0 0.0
    %1600 = vmatpush1.msra.mxu0 %v1562
    %1601 = vmatprep.subr.mxu0 0.0
    %1602 = vmatpush1.msra.mxu0 %v1561
    %1603 = vmatprep.subr.mxu0 0.0
    %1604 = vmatpush1.msra.mxu0 %v1560
    %1605 = vmatprep.subr.mxu0 0.0
    %1606 = vmatpush2.msra.mxu0 0.0
    %1607 = vmatprep.subr.mxu0 0.0
    %1608 = vmatpush2.msra.mxu0 0.0
    %1609 = vmatprep.subr.mxu0 0.0
    %1610 = vmatpush2.msra.mxu0 0.0
    %1611 = vmatprep.subr.mxu0 0.0
    %1612 = vmatpush2.msra.mxu0 0.0
    %1613 = vmatprep.subr.mxu0 0.0
    %1614 = vmatpush2.msra.mxu0 0.0
    %1615 = vmatprep.subr.mxu0 0.0
    %1616 = vmatpush2.msra.mxu0 0.0
    %1617 = vmatprep.subr.mxu0 0.0
    %1618 = vmatpush2.msra.mxu0 0.0
    %1619 = vmatprep.subr.mxu0 0.0
    %1620 = vmatpush2.msra.mxu0 0.0
    %1621 = vmatprep.subr.mxu0 0.0
    %1622 = vmatpush2.msra.mxu0 0.0
    %1623 = vmatprep.subr.mxu0 0.0
    %1624 = vmatpush2.msra.mxu0 0.0
    %1625 = vmatprep.subr.mxu0 0.0
    %1626 = vmatpush2.msra.mxu0 0.0
    %1627 = vmatprep.subr.mxu0 0.0
    %1628 = vmatpush2.msra.mxu0 0.0
    %1629 = vmatprep.subr.mxu0 0.0
    %1630 = vmatpush2.msra.mxu0 0.0
    %1631 = vmatprep.subr.mxu0 0.0
    %1632 = vmatpush2.msra.mxu0 0.0
    %1633 = vmatprep.subr.mxu0 0.0
    %1634 = vmatpush2.msra.mxu0 0.0
    %1635 = vmatprep.subr.mxu0 0.0
    %1636 = vmatpush2.msra.mxu0 0.0
    %1637 = vmatprep.mubr.f32.mxu0 0.0
    %1638 = vmatmul.mubr.f32.gmra.mxu0 %v1568
    %v1639 = vpop.f32.mrf.mxu0
    %v1640 = vadd.f32 0.0, %v1639
    %v1641 = vpop.f32.mrf.mxu0
    %1642 = vdwg.mxu0
    %v1643 = vadd.f32 %v1537, %v1640
    %1645 = vrot.lane.b32.xlu0 %v1537, 32
    %v1646 = vpop.permute.xlu0 %1645
    %v1648 = vmul.f32 %v243, %v1646
    %v1649 = vld [vmem:[%s19] sm:$0xf]
    %1651 = vrot.lane.b32.xlu0 %v1648, 124
    %v1652 = vpop.permute.xlu0 %1651
    %v1653 = vsel %vm252, %v1652, 0
    %v1656 = vsel %vm256, %v1649, 0
    %1658 = vmatprep.subr.mxu0 0.0
    %1659 = vmatpush1.msra.mxu0 0.0
    %1660 = vmatprep.subr.mxu0 0.0
    %1661 = vmatpush1.msra.mxu0 0.0
    %1662 = vmatprep.subr.mxu0 0.0
    %1663 = vmatpush1.msra.mxu0 0.0
    %1664 = vmatprep.subr.mxu0 0.0
    %1665 = vmatpush1.msra.mxu0 0.0
    %1666 = vmatprep.subr.mxu0 0.0
    %1667 = vmatpush1.msra.mxu0 0.0
    %1668 = vmatprep.subr.mxu0 0.0
    %1669 = vmatpush1.msra.mxu0 0.0
    %1670 = vmatprep.subr.mxu0 0.0
    %1671 = vmatpush1.msra.mxu0 0.0
    %1672 = vmatprep.subr.mxu0 0.0
    %1673 = vmatpush1.msra.mxu0 0.0
    %1674 = vmatprep.subr.mxu0 0.0
    %1675 = vmatpush1.msra.mxu0 0.0
    %1676 = vmatprep.subr.mxu0 0.0
    %1677 = vmatpush1.msra.mxu0 0.0
    %1678 = vmatprep.subr.mxu0 0.0
    %1679 = vmatpush1.msra.mxu0 0.0
    %1680 = vmatprep.subr.mxu0 0.0
    %1681 = vmatpush1.msra.mxu0 0.0
    %1682 = vmatprep.subr.mxu0 0.0
    %1683 = vmatpush1.msra.mxu0 0.0
    %1684 = vmatprep.subr.mxu0 0.0
    %1685 = vmatpush1.msra.mxu0 0.0
    %1686 = vmatprep.subr.mxu0 0.0
    %1687 = vmatpush1.msra.mxu0 0.0
    %1688 = vmatprep.subr.mxu0 0.0
    %1689 = vmatpush1.msra.mxu0 %v1656
    %1690 = vmatprep.subr.mxu0 0.0
    %1691 = vmatpush2.msra.mxu0 0.0
    %1692 = vmatprep.subr.mxu0 0.0
    %1693 = vmatpush2.msra.mxu0 0.0
    %1694 = vmatprep.subr.mxu0 0.0
    %1695 = vmatpush2.msra.mxu0 0.0
    %1696 = vmatprep.subr.mxu0 0.0
    %1697 = vmatpush2.msra.mxu0 0.0
    %1698 = vmatprep.subr.mxu0 0.0
    %1699 = vmatpush2.msra.mxu0 0.0
    %1700 = vmatprep.subr.mxu0 0.0
    %1701 = vmatpush2.msra.mxu0 0.0
    %1702 = vmatprep.subr.mxu0 0.0
    %1703 = vmatpush2.msra.mxu0 0.0
    %1704 = vmatprep.subr.mxu0 0.0
    %1705 = vmatpush2.msra.mxu0 0.0
    %1706 = vmatprep.subr.mxu0 0.0
    %1707 = vmatpush2.msra.mxu0 0.0
    %1708 = vmatprep.subr.mxu0 0.0
    %1709 = vmatpush2.msra.mxu0 0.0
    %1710 = vmatprep.subr.mxu0 0.0
    %1711 = vmatpush2.msra.mxu0 0.0
    %1712 = vmatprep.subr.mxu0 0.0
    %1713 = vmatpush2.msra.mxu0 0.0
    %1714 = vmatprep.subr.mxu0 0.0
    %1715 = vmatpush2.msra.mxu0 0.0
    %1716 = vmatprep.subr.mxu0 0.0
    %1717 = vmatpush2.msra.mxu0 0.0
    %1718 = vmatprep.subr.mxu0 0.0
    %1719 = vmatpush2.msra.mxu0 0.0
    %1720 = vmatprep.subr.mxu0 0.0
    %1721 = vmatpush2.msra.mxu0 0.0
    %1722 = vmatprep.mubr.f32.mxu0 0.0
    %1723 = vmatmul.mubr.f32.gmra.mxu0 %v1653
    %v1724 = vpop.f32.mrf.mxu0
    %v1725 = vadd.f32 0.0, %v1724
    %v1726 = vpop.f32.mrf.mxu0
    %1727 = vdwg.mxu0
    %v1728 = vadd.f32 %v1643, %v1725
    %vm1729 = vcmp.gt.f32.partialorder %v1728, 20.0
    %v1730 = vmin.f32 %v1728, 20.0
    %v1731 = vmul.f32 %v1730, 1.442695
    %v1732 = vpow.pop %v1731
    %v1733 = vadd.f32 %v1732, 1.0
    %v1734 = vlog2.pop %v1733
    %v1735 = vmul.f32 %v1734, 0.6931472
    %v1736 = vmul.f32 -0.5, %v1732
    %v1737 = vadd.f32 %v1736, 1.0
    %v1738 = vmul.f32 %v1737, %v1732
    %v1739 = vand.u32 2147483647, %v1732
    %vm1740 = vcmp.lt.f32.partialorder %v1739, 0.0004427343
    %v1741 = vsel %vm1740, %v1738, %v1735
    %v1742 = vsel %vm1729, %v1728, %v1741
    %vm1743 = vcmp.gt.f32.partialorder %v1539, 20.0
    %v1744 = vmin.f32 %v1539, 20.0
    %v1745 = vmul.f32 %v1744, 1.442695
    %v1746 = vpow.pop %v1745
    %v1747 = vadd.f32 %v1746, 1.0
    %v1748 = vlog2.pop %v1747
    %v1749 = vmul.f32 %v1748, 0.6931472
    %v1750 = vmul.f32 -0.5, %v1746
    %v1751 = vadd.f32 %v1750, 1.0
    %v1752 = vmul.f32 %v1751, %v1746
    %v1753 = vand.u32 2147483647, %v1746
    %vm1754 = vcmp.lt.f32.partialorder %v1753, 0.0004427343
    %v1755 = vsel %vm1754, %v1752, %v1749
    %v1756 = vsel %vm1743, %v1539, %v1755
    %v1757 = vld [vmem:[#allocation21] sm:$0xff]
    %v1758 = vld [vmem:[#allocation21 + $0x8] sm:$0xff]
    %v1759 = vld [vmem:[#allocation21 + $0x10] sm:$0xff]
    %v1760 = vld [vmem:[#allocation21 + $0x18] sm:$0xff]
    %v1761 = vld [vmem:[#allocation21 + $0x20] sm:$0xff]
    %v1762 = vld [vmem:[#allocation21 + $0x28] sm:$0xff]
    %v1763 = vld [vmem:[#allocation21 + $0x30] sm:$0x3]
    %v1764 = vld [vmem:[%s21] sm:$0x1]
    %v1766 = vlaneseq
    %v1767 = vshrl.u32 %v1766, 7
    %v1768 = vsub.s32 0, %v1767
    %v1769 = vrot.slane %v1764, %v1768
    %1772 = vrot.lane.b32.xlu0 %v1554, 24
    %v1773 = vpop.permute.xlu0 %1772
    %1774 = vrot.lane.b32.xlu0 %v1756, 24
    %v1775 = vpop.permute.xlu0 %1774
    %v1776 = vsel %vm806, %v1773, %v1775
    %v1777 = vsel %vm476, %v1776, 0
    %v1780 = vsel %vm479, %v1763, 0
    %1782 = vmatprep.subr.mxu0 0.0
    %1783 = vmatpush1.msra.mxu0 0.0
    %1784 = vmatprep.subr.mxu0 0.0
    %1785 = vmatpush1.msra.mxu0 0.0
    %1786 = vmatprep.subr.mxu0 0.0
    %1787 = vmatpush1.msra.mxu0 0.0
    %1788 = vmatprep.subr.mxu0 0.0
    %1789 = vmatpush1.msra.mxu0 0.0
    %1790 = vmatprep.subr.mxu0 0.0
    %1791 = vmatpush1.msra.mxu0 0.0
    %1792 = vmatprep.subr.mxu0 0.0
    %1793 = vmatpush1.msra.mxu0 0.0
    %1794 = vmatprep.subr.mxu0 0.0
    %1795 = vmatpush1.msra.mxu0 0.0
    %1796 = vmatprep.subr.mxu0 0.0
    %1797 = vmatpush1.msra.mxu0 0.0
    %1798 = vmatprep.subr.mxu0 0.0
    %1799 = vmatpush1.msra.mxu0 0.0
    %1800 = vmatprep.subr.mxu0 0.0
    %1801 = vmatpush1.msra.mxu0 %v1780
    %1802 = vmatprep.subr.mxu0 0.0
    %1803 = vmatpush1.msra.mxu0 %v1762
    %1804 = vmatprep.subr.mxu0 0.0
    %1805 = vmatpush1.msra.mxu0 %v1761
    %1806 = vmatprep.subr.mxu0 0.0
    %1807 = vmatpush1.msra.mxu0 %v1760
    %1808 = vmatprep.subr.mxu0 0.0
    %1809 = vmatpush1.msra.mxu0 %v1759
    %1810 = vmatprep.subr.mxu0 0.0
    %1811 = vmatpush1.msra.mxu0 %v1758
    %1812 = vmatprep.subr.mxu0 0.0
    %1813 = vmatpush1.msra.mxu0 %v1757
    %1814 = vmatprep.subr.mxu0 0.0
    %1815 = vmatpush2.msra.mxu0 0.0
    %1816 = vmatprep.subr.mxu0 0.0
    %1817 = vmatpush2.msra.mxu0 0.0
    %1818 = vmatprep.subr.mxu0 0.0
    %1819 = vmatpush2.msra.mxu0 0.0
    %1820 = vmatprep.subr.mxu0 0.0
    %1821 = vmatpush2.msra.mxu0 0.0
    %1822 = vmatprep.subr.mxu0 0.0
    %1823 = vmatpush2.msra.mxu0 0.0
    %1824 = vmatprep.subr.mxu0 0.0
    %1825 = vmatpush2.msra.mxu0 0.0
    %1826 = vmatprep.subr.mxu0 0.0
    %1827 = vmatpush2.msra.mxu0 0.0
    %1828 = vmatprep.subr.mxu0 0.0
    %1829 = vmatpush2.msra.mxu0 0.0
    %1830 = vmatprep.subr.mxu0 0.0
    %1831 = vmatpush2.msra.mxu0 0.0
    %1832 = vmatprep.subr.mxu0 0.0
    %1833 = vmatpush2.msra.mxu0 0.0
    %1834 = vmatprep.subr.mxu0 0.0
    %1835 = vmatpush2.msra.mxu0 0.0
    %1836 = vmatprep.subr.mxu0 0.0
    %1837 = vmatpush2.msra.mxu0 0.0
    %1838 = vmatprep.subr.mxu0 0.0
    %1839 = vmatpush2.msra.mxu0 0.0
    %1840 = vmatprep.subr.mxu0 0.0
    %1841 = vmatpush2.msra.mxu0 0.0
    %1842 = vmatprep.subr.mxu0 0.0
    %1843 = vmatpush2.msra.mxu0 0.0
    %1844 = vmatprep.subr.mxu0 0.0
    %1845 = vmatpush2.msra.mxu0 0.0
    %1846 = vmatprep.mubr.f32.mxu0 0.0
    %1847 = vmatmul.mubr.f32.gmra.mxu0 %v1777
    %v1848 = vpop.f32.mrf.mxu0
    %v1849 = vadd.f32 %v1769, %v1848
    %v1850 = vpop.f32.mrf.mxu0
    %1851 = vdwg.mxu0
    %vm1852 = vcmp.gt.f32.partialorder %v1849, 20.0
    %v1853 = vmin.f32 %v1849, 20.0
    %v1854 = vmul.f32 %v1853, 1.442695
    %v1855 = vpow.pop %v1854
    %v1856 = vadd.f32 %v1855, 1.0
    %v1857 = vlog2.pop %v1856
    %v1858 = vmul.f32 %v1857, 0.6931472
    %v1859 = vmul.f32 -0.5, %v1855
    %v1860 = vadd.f32 %v1859, 1.0
    %v1861 = vmul.f32 %v1860, %v1855
    %v1862 = vand.u32 2147483647, %v1855
    %vm1863 = vcmp.lt.f32.partialorder %v1862, 0.0004427343
    %v1864 = vsel %vm1863, %v1861, %v1858
    %v1865 = vsel %vm1852, %v1849, %v1864
    %1867 = vrot.lane.b32.xlu0 %v1865, 127
    %v1868 = vpop.permute.xlu0 %1867
    %v1870 = vmul.f32 %v1742, %v1868
    %v1871 = vld [vmem:[%s22] sm:$0xff]
    %v1872 = vld [vmem:[%s22 + $0x8] sm:$0xff]
    %v1873 = vld [vmem:[%s22 + $0x10] sm:$0xff]
    %v1874 = vld [vmem:[%s22 + $0x18] sm:$0xff]
    %v1875 = vld [vmem:[%s22 + $0x20] sm:$0xff]
    %v1876 = vld [vmem:[%s22 + $0x28] sm:$0xff]
    %v1877 = vld [vmem:[%s22 + $0x30] sm:$0x3]
    %v1879 = vsel %vm476, %v1870, 0
    %v1882 = vsel %vm479, %v1877, 0
    %1884 = vmatprep.subr.mxu0 0.0
    %1885 = vmatpush1.msra.mxu0 0.0
    %1886 = vmatprep.subr.mxu0 0.0
    %1887 = vmatpush1.msra.mxu0 0.0
    %1888 = vmatprep.subr.mxu0 0.0
    %1889 = vmatpush1.msra.mxu0 0.0
    %1890 = vmatprep.subr.mxu0 0.0
    %1891 = vmatpush1.msra.mxu0 0.0
    %1892 = vmatprep.subr.mxu0 0.0
    %1893 = vmatpush1.msra.mxu0 0.0
    %1894 = vmatprep.subr.mxu0 0.0
    %1895 = vmatpush1.msra.mxu0 0.0
    %1896 = vmatprep.subr.mxu0 0.0
    %1897 = vmatpush1.msra.mxu0 0.0
    %1898 = vmatprep.subr.mxu0 0.0
    %1899 = vmatpush1.msra.mxu0 0.0
    %1900 = vmatprep.subr.mxu0 0.0
    %1901 = vmatpush1.msra.mxu0 0.0
    %1902 = vmatprep.subr.mxu0 0.0
    %1903 = vmatpush1.msra.mxu0 %v1882
    %1904 = vmatprep.subr.mxu0 0.0
    %1905 = vmatpush1.msra.mxu0 %v1876
    %1906 = vmatprep.subr.mxu0 0.0
    %1907 = vmatpush1.msra.mxu0 %v1875
    %1908 = vmatprep.subr.mxu0 0.0
    %1909 = vmatpush1.msra.mxu0 %v1874
    %1910 = vmatprep.subr.mxu0 0.0
    %1911 = vmatpush1.msra.mxu0 %v1873
    %1912 = vmatprep.subr.mxu0 0.0
    %1913 = vmatpush1.msra.mxu0 %v1872
    %1914 = vmatprep.subr.mxu0 0.0
    %1915 = vmatpush1.msra.mxu0 %v1871
    %1916 = vmatprep.subr.mxu0 0.0
    %1917 = vmatpush2.msra.mxu0 0.0
    %1918 = vmatprep.subr.mxu0 0.0
    %1919 = vmatpush2.msra.mxu0 0.0
    %1920 = vmatprep.subr.mxu0 0.0
    %1921 = vmatpush2.msra.mxu0 0.0
    %1922 = vmatprep.subr.mxu0 0.0
    %1923 = vmatpush2.msra.mxu0 0.0
    %1924 = vmatprep.subr.mxu0 0.0
    %1925 = vmatpush2.msra.mxu0 0.0
    %1926 = vmatprep.subr.mxu0 0.0
    %1927 = vmatpush2.msra.mxu0 0.0
    %1928 = vmatprep.subr.mxu0 0.0
    %1929 = vmatpush2.msra.mxu0 0.0
    %1930 = vmatprep.subr.mxu0 0.0
    %1931 = vmatpush2.msra.mxu0 0.0
    %1932 = vmatprep.subr.mxu0 0.0
    %1933 = vmatpush2.msra.mxu0 0.0
    %1934 = vmatprep.subr.mxu0 0.0
    %1935 = vmatpush2.msra.mxu0 0.0
    %1936 = vmatprep.subr.mxu0 0.0
    %1937 = vmatpush2.msra.mxu0 0.0
    %1938 = vmatprep.subr.mxu0 0.0
    %1939 = vmatpush2.msra.mxu0 0.0
    %1940 = vmatprep.subr.mxu0 0.0
    %1941 = vmatpush2.msra.mxu0 0.0
    %1942 = vmatprep.subr.mxu0 0.0
    %1943 = vmatpush2.msra.mxu0 0.0
    %1944 = vmatprep.subr.mxu0 0.0
    %1945 = vmatpush2.msra.mxu0 0.0
    %1946 = vmatprep.subr.mxu0 0.0
    %1947 = vmatpush2.msra.mxu0 0.0
    %1948 = vmatprep.mubr.f32.mxu0 0.0
    %1949 = vmatmul.mubr.f32.gmra.mxu0 %v1879
    %v1950 = vpop.f32.mrf.mxu0
    %v1951 = vadd.f32 0.0, %v1950
    %v1952 = vpop.f32.mrf.mxu0
    %1953 = vdwg.mxu0
    %v1954 = vadd.f32 %v1849, %v1951
    %1956 = vrot.lane.b32.xlu0 %v1849, 81
    %v1957 = vpop.permute.xlu0 %1956
    %v1959 = vmul.f32 %v243, %v1957
    %v1960 = vld [vmem:[%s23] sm:$0xf]
    %1962 = vrot.lane.b32.xlu0 %v1959, 124
    %v1963 = vpop.permute.xlu0 %1962
    %v1964 = vsel %vm252, %v1963, 0
    %v1967 = vsel %vm256, %v1960, 0
    %1969 = vmatprep.subr.mxu0 0.0
    %1970 = vmatpush1.msra.mxu0 0.0
    %1971 = vmatprep.subr.mxu0 0.0
    %1972 = vmatpush1.msra.mxu0 0.0
    %1973 = vmatprep.subr.mxu0 0.0
    %1974 = vmatpush1.msra.mxu0 0.0
    %1975 = vmatprep.subr.mxu0 0.0
    %1976 = vmatpush1.msra.mxu0 0.0
    %1977 = vmatprep.subr.mxu0 0.0
    %1978 = vmatpush1.msra.mxu0 0.0
    %1979 = vmatprep.subr.mxu0 0.0
    %1980 = vmatpush1.msra.mxu0 0.0
    %1981 = vmatprep.subr.mxu0 0.0
    %1982 = vmatpush1.msra.mxu0 0.0
    %1983 = vmatprep.subr.mxu0 0.0
    %1984 = vmatpush1.msra.mxu0 0.0
    %1985 = vmatprep.subr.mxu0 0.0
    %1986 = vmatpush1.msra.mxu0 0.0
    %1987 = vmatprep.subr.mxu0 0.0
    %1988 = vmatpush1.msra.mxu0 0.0
    %1989 = vmatprep.subr.mxu0 0.0
    %1990 = vmatpush1.msra.mxu0 0.0
    %1991 = vmatprep.subr.mxu0 0.0
    %1992 = vmatpush1.msra.mxu0 0.0
    %1993 = vmatprep.subr.mxu0 0.0
    %1994 = vmatpush1.msra.mxu0 0.0
    %1995 = vmatprep.subr.mxu0 0.0
    %1996 = vmatpush1.msra.mxu0 0.0
    %1997 = vmatprep.subr.mxu0 0.0
    %1998 = vmatpush1.msra.mxu0 0.0
    %1999 = vmatprep.subr.mxu0 0.0
    %2000 = vmatpush1.msra.mxu0 %v1967
    %2001 = vmatprep.subr.mxu0 0.0
    %2002 = vmatpush2.msra.mxu0 0.0
    %2003 = vmatprep.subr.mxu0 0.0
    %2004 = vmatpush2.msra.mxu0 0.0
    %2005 = vmatprep.subr.mxu0 0.0
    %2006 = vmatpush2.msra.mxu0 0.0
    %2007 = vmatprep.subr.mxu0 0.0
    %2008 = vmatpush2.msra.mxu0 0.0
    %2009 = vmatprep.subr.mxu0 0.0
    %2010 = vmatpush2.msra.mxu0 0.0
    %2011 = vmatprep.subr.mxu0 0.0
    %2012 = vmatpush2.msra.mxu0 0.0
    %2013 = vmatprep.subr.mxu0 0.0
    %2014 = vmatpush2.msra.mxu0 0.0
    %2015 = vmatprep.subr.mxu0 0.0
    %2016 = vmatpush2.msra.mxu0 0.0
    %2017 = vmatprep.subr.mxu0 0.0
    %2018 = vmatpush2.msra.mxu0 0.0
    %2019 = vmatprep.subr.mxu0 0.0
    %2020 = vmatpush2.msra.mxu0 0.0
    %2021 = vmatprep.subr.mxu0 0.0
    %2022 = vmatpush2.msra.mxu0 0.0
    %2023 = vmatprep.subr.mxu0 0.0
    %2024 = vmatpush2.msra.mxu0 0.0
    %2025 = vmatprep.subr.mxu0 0.0
    %2026 = vmatpush2.msra.mxu0 0.0
    %2027 = vmatprep.subr.mxu0 0.0
    %2028 = vmatpush2.msra.mxu0 0.0
    %2029 = vmatprep.subr.mxu0 0.0
    %2030 = vmatpush2.msra.mxu0 0.0
    %2031 = vmatprep.subr.mxu0 0.0
    %2032 = vmatpush2.msra.mxu0 0.0
    %2033 = vmatprep.mubr.f32.mxu0 0.0
    %2034 = vmatmul.mubr.f32.gmra.mxu0 %v1964
    %v2035 = vpop.f32.mrf.mxu0
    %v2036 = vadd.f32 0.0, %v2035
    %v2037 = vpop.f32.mrf.mxu0
    %2038 = vdwg.mxu0
    %v2039 = vadd.f32 %v1954, %v2036
    %vm2040 = vcmp.gt.f32.partialorder %v2039, 20.0
    %v2041 = vmin.f32 %v2039, 20.0
    %v2042 = vmul.f32 %v2041, 1.442695
    %v2043 = vpow.pop %v2042
    %v2044 = vadd.f32 %v2043, 1.0
    %v2045 = vlog2.pop %v2044
    %v2046 = vmul.f32 %v2045, 0.6931472
    %v2047 = vmul.f32 -0.5, %v2043
    %v2048 = vadd.f32 %v2047, 1.0
    %v2049 = vmul.f32 %v2048, %v2043
    %v2050 = vand.u32 2147483647, %v2043
    %vm2051 = vcmp.lt.f32.partialorder %v2050, 0.0004427343
    %v2052 = vsel %vm2051, %v2049, %v2046
    %v2053 = vsel %vm2040, %v2039, %v2052
    %vm2054 = vcmask 7168
    %2055 = vst.msk [vmem:[%s24] sm:$0xff] %vm2054, %v2053
    // Predicated region
    $region150: #{tpu_custom_call.1} parent=1 // pred_check
      _
    $region151: #{tpu_custom_call.1} parent=1 // pred_check_branch
      %2057 = sbr.rel (0) target = $region153
    $region152: #{tpu_custom_call.1} parent=1 // pred_region
      _
    $region153: #{tpu_custom_call.1} parent=1 // pred_fallthru
      _
    // Predicated region
    $region154: #{tpu_custom_call.1} parent=1 // pred_check
      _
    $region155: #{tpu_custom_call.1} parent=1 // pred_check_branch
      %2059 = sbr.rel (0) target = $region157
    $region156: #{tpu_custom_call.1} parent=1 // pred_region
      _
    $region157: #{tpu_custom_call.1} parent=1 // pred_fallthru
      _
    %2060 = vsyncpa [#allocation3], 1
    %2061 = vsyncpa [#allocation5], 1
    %2062 = vsyncpa [#allocation8], 1
    %2063 = vsyncpa [#allocation11], 1
    %2064 = vsyncpa [#allocation14], 1
    %2065 = vsyncpa [#allocation17], 1
    %2066 = vsyncpa [#allocation20], 1

</llo_original>
